<compile_context>
chip_gen: v7x
topology: tpu7x:2x2x1
jax: 0.10.0
libtpu: 0.0.40
codegen_flags: <defaults>
</compile_context>

<pallas_src>
import jax
import jax.numpy as jnp
from jax import lax
from jax.experimental import pallas as pl
from jax.experimental.pallas import tpu as pltpu

EPS = 1e-5
LANES = 128
VMEM_LIMIT = 48 * 1024 * 1024


def _relu6(v):
    return jnp.minimum(jnp.maximum(v, 0.0), 6.0)


# ----------------------------------------------------------------------------
# Kernel 1: fused ReLU6 + depthwise 3x3 stride-2 conv + BN1 partial statistics.
# The padded input is phase-decomposed (even/odd rows x even/odd cols) in the
# wrapper so every tap inside the kernel is a unit-stride slice.
# ----------------------------------------------------------------------------
def dw_conv_stats_kernel(xee_ref, xeo_ref, xoe_ref, xoo_ref, w_ref,
                         o_ref, s_ref, q_ref):
    Ho, Wo = o_ref.shape[1], o_ref.shape[2]
    phases = {
        (0, 0): _relu6(xee_ref[0]),
        (0, 1): _relu6(xeo_ref[0]),
        (1, 0): _relu6(xoe_ref[0]),
        (1, 1): _relu6(xoo_ref[0]),
    }
    w = w_ref[...]                              # (3, 3, 128)
    acc = jnp.zeros((Ho, Wo, LANES), jnp.float32)
    for kh in range(3):
        for kw in range(3):
            tap = phases[(kh % 2, kw % 2)][kh // 2:kh // 2 + Ho,
                                           kw // 2:kw // 2 + Wo, :]
            acc = acc + tap * w[kh, kw]         # per-channel (depthwise) MAC
    o_ref[0] = acc
    # per-channel partial sums for BatchNorm2d(96) batch statistics
    s = jnp.sum(jnp.sum(acc, axis=0), axis=0, keepdims=True)          # (1, 128)
    q = jnp.sum(jnp.sum(acc * acc, axis=0), axis=0, keepdims=True)    # (1, 128)
    s_ref[...] = jnp.broadcast_to(s, s_ref.shape)
    q_ref[...] = jnp.broadcast_to(q, q_ref.shape)


# ----------------------------------------------------------------------------
# Kernel 2: fused BN1 (precomputed scale/shift) + ReLU6 + 1x1 conv (MXU matmul)
#           + BN2 partial statistics.
# ----------------------------------------------------------------------------
def bn_relu6_matmul_stats_kernel(x_ref, scale_ref, shift_ref, w_ref,
                                 y_ref, s_ref, q_ref):
    xb = _relu6(x_ref[...] * scale_ref[...] + shift_ref[...])
    y = jnp.dot(xb, w_ref[...], preferred_element_type=jnp.float32)
    y_ref[...] = y
    s_ref[...] = jnp.broadcast_to(jnp.sum(y, axis=0, keepdims=True), s_ref.shape)
    q_ref[...] = jnp.broadcast_to(jnp.sum(y * y, axis=0, keepdims=True), q_ref.shape)


# ----------------------------------------------------------------------------
# Kernel 3: BN2 apply (elementwise scale/shift), lane-dense 128-wide output.
# ----------------------------------------------------------------------------
def bn_apply_kernel(x_ref, scale_ref, shift_ref, o_ref):
    o_ref[...] = x_ref[...] * scale_ref[...] + shift_ref[...]


# ----------------------------------------------------------------------------
# Wrappers
# ----------------------------------------------------------------------------
def depthwise_conv_relu6_stats(x_nhwc, w_dw):
    # x_nhwc: (N, H, W, 128) f32 (channel padded); w_dw: (3, 3, 128)
    N, H, W, C = x_nhwc.shape
    assert C == LANES and H % 2 == 0 and W % 2 == 0
    Ho, Wo = H // 2, W // 2

    # pad + phase split (all data-movement ops, fused by XLA with the entry
    # transpose; the kernel then reads each element exactly once)
    xp = jnp.pad(x_nhwc, ((0, 0), (1, 1), (1, 1), (0, 0)))
    xe = xp[:, 0::2]                      # (N, Ho+1, W+2, C)
    xo = xp[:, 1::2][:, :Ho]              # (N, Ho,   W+2, C)
    xee = xe[:, :, 0::2]                  # (N, Ho+1, Wo+1, C)
    xeo = xe[:, :, 1::2][:, :, :Wo]       # (N, Ho+1, Wo,   C)
    xoe = xo[:, :, 0::2]                  # (N, Ho,   Wo+1, C)
    xoo = xo[:, :, 1::2][:, :, :Wo]       # (N, Ho,   Wo,   C)

    def in_spec(a):
        return pl.BlockSpec((1,) + a.shape[1:], lambda n: (n, 0, 0, 0))

    return pl.pallas_call(
        dw_conv_stats_kernel,
        out_shape=(jax.ShapeDtypeStruct((N, Ho, Wo, C), jnp.float32),
                   jax.ShapeDtypeStruct((8 * N, C), jnp.float32),
                   jax.ShapeDtypeStruct((8 * N, C), jnp.float32)),
        grid=(N,),
        in_specs=[in_spec(xee), in_spec(xeo), in_spec(xoe), in_spec(xoo),
                  pl.BlockSpec(w_dw.shape, lambda n: (0, 0, 0))],
        out_specs=(pl.BlockSpec((1, Ho, Wo, C), lambda n: (n, 0, 0, 0)),
                   pl.BlockSpec((8, C), lambda n: (n, 0)),
                   pl.BlockSpec((8, C), lambda n: (n, 0))),
        compiler_params=pltpu.CompilerParams(
            dimension_semantics=("parallel",),
            vmem_limit_bytes=VMEM_LIMIT),
    )(xee, xeo, xoe, xoo, w_dw)


def bn_relu6_matmul_stats(x2d, scale, shift, w, tr):
    R, C = x2d.shape
    Co = w.shape[1]
    nblk = R // tr
    return pl.pallas_call(
        bn_relu6_matmul_stats_kernel,
        out_shape=(jax.ShapeDtypeStruct((R, Co), jnp.float32),
                   jax.ShapeDtypeStruct((8 * nblk, Co), jnp.float32),
                   jax.ShapeDtypeStruct((8 * nblk, Co), jnp.float32)),
        grid=(nblk,),
        in_specs=[pl.BlockSpec((tr, C), lambda i: (i, 0)),
                  pl.BlockSpec((1, C), lambda i: (0, 0)),
                  pl.BlockSpec((1, C), lambda i: (0, 0)),
                  pl.BlockSpec((C, Co), lambda i: (0, 0))],
        out_specs=(pl.BlockSpec((tr, Co), lambda i: (i, 0)),
                   pl.BlockSpec((8, Co), lambda i: (i, 0)),
                   pl.BlockSpec((8, Co), lambda i: (i, 0))),
        compiler_params=pltpu.CompilerParams(
            dimension_semantics=("parallel",),
            vmem_limit_bytes=VMEM_LIMIT),
    )(x2d, scale, shift, w)


def bn_apply(x2d, scale, shift, tr):
    R, C = x2d.shape
    return pl.pallas_call(
        bn_apply_kernel,
        out_shape=jax.ShapeDtypeStruct((R, C), jnp.float32),
        grid=(R // tr,),
        in_specs=[pl.BlockSpec((tr, C), lambda i: (i, 0)),
                  pl.BlockSpec((1, C), lambda i: (0, 0)),
                  pl.BlockSpec((1, C), lambda i: (0, 0))],
        out_specs=pl.BlockSpec((tr, C), lambda i: (i, 0)),
        compiler_params=pltpu.CompilerParams(
            dimension_semantics=("parallel",),
            vmem_limit_bytes=VMEM_LIMIT),
    )(x2d, scale, shift)


def _pick_tile(r, cap=2048):
    # largest divisor of r that is <= cap and a multiple of 8 (else full r)
    for t in range(min(r, cap), 7, -1):
        if r % t == 0 and t % 8 == 0:
            return t
    return r


def model_forward(x_nchw, w_dw, w_pw, g1, b1, g2, b2):
    # x_nchw: (N, 96, H, W) f32; w_dw: (3,3,96); w_pw: (96,24)
    N, Cin, H, W = x_nchw.shape
    Cout = w_pw.shape[1]
    cpad = LANES - Cin
    copad = LANES - Cout

    # NCHW -> NHWC, zero-pad the channel (lane) dim to 128 once; zero columns
    # are exact no-ops for the conv / matmul / BN math below.
    x = jnp.transpose(x_nchw, (0, 2, 3, 1)).astype(jnp.float32)
    x = jnp.pad(x, ((0, 0), (0, 0), (0, 0), (0, cpad)))
    w_dw_p = jnp.pad(w_dw.astype(jnp.float32), ((0, 0), (0, 0), (0, cpad)))
    w_pw_p = jnp.pad(w_pw.astype(jnp.float32), ((0, cpad), (0, copad)))
    g1p = jnp.pad(g1.astype(jnp.float32), (0, cpad))
    b1p = jnp.pad(b1.astype(jnp.float32), (0, cpad))
    g2p = jnp.pad(g2.astype(jnp.float32), (0, copad))
    b2p = jnp.pad(b2.astype(jnp.float32), (0, copad))

    # ReLU6 + depthwise 3x3/s2 conv + fused BN1 partial stats
    dw, s1p, q1p = depthwise_conv_relu6_stats(x, w_dw_p)     # (N,Ho,Wo,128)
    _, Ho, Wo, _ = dw.shape
    R = N * Ho * Wo
    tr = _pick_tile(R)

    # BatchNorm2d(96) batch statistics (biased variance)
    s1 = jnp.sum(s1p, axis=0) / 8.0                          # (128,)
    q1 = jnp.sum(q1p, axis=0) / 8.0
    mean1 = s1 / R
    var1 = jnp.maximum(q1 / R - mean1 * mean1, 0.0)
    inv1 = g1p / jnp.sqrt(var1 + EPS)                        # 0 on padded chans
    scale1 = inv1[None, :]
    shift1 = (b1p - mean1 * inv1)[None, :]

    # fused BN1 + ReLU6 + 1x1 conv (channel matmul 128->128 padded) + BN2 stats
    dwf = dw.reshape(R, LANES)
    y, s2p, q2p = bn_relu6_matmul_stats(dwf, scale1, shift1, w_pw_p, tr)

    # BatchNorm2d(24) batch statistics
    s2 = jnp.sum(s2p, axis=0) / 8.0
    q2 = jnp.sum(q2p, axis=0) / 8.0
    mean2 = s2 / R
    var2 = jnp.maximum(q2 / R - mean2 * mean2, 0.0)
    inv2 = g2p / jnp.sqrt(var2 + EPS)                        # 0 on padded chans
    scale2 = inv2[None, :]
    shift2 = (b2p - mean2 * inv2)[None, :]

    out_p = bn_apply(y, scale2, shift2, tr)                  # (R, 128)

    # strip channel padding and return the PyTorch NCHW layout (tiny tensor)
    out = out_p[:, :Cout].reshape(N, Ho, Wo, Cout).transpose(0, 3, 1, 2)
    return out


# ----------------------------------------------------------------------------
# Pure-JAX reference (semantics of the PyTorch module in training mode)
# ----------------------------------------------------------------------------
def reference_forward(x_nchw, w_dw_oihw, w_pw_oihw, g1, b1, g2, b2):
    x = jnp.clip(x_nchw, 0.0, 6.0)
    y = lax.conv_general_dilated(
        x, w_dw_oihw, window_strides=(2, 2), padding=((1, 1), (1, 1)),
        dimension_numbers=("NCHW", "OIHW", "NCHW"),
        feature_group_count=x.shape[1])
    m = y.mean(axis=(0, 2, 3), keepdims=True)
    v = y.var(axis=(0, 2, 3), keepdims=True)
    y = (y - m) / jnp.sqrt(v + EPS) * g1[None, :, None, None] + b1[None, :, None, None]
    y = jnp.clip(y, 0.0, 6.0)
    z = lax.conv_general_dilated(
        y, w_pw_oihw, window_strides=(1, 1), padding="VALID",
        dimension_numbers=("NCHW", "OIHW", "NCHW"))
    m2 = z.mean(axis=(0, 2, 3), keepdims=True)
    v2 = z.var(axis=(0, 2, 3), keepdims=True)
    return (z - m2) / jnp.sqrt(v2 + EPS) * g2[None, :, None, None] + b2[None, :, None, None]


if __name__ == "__main__":
    key = jax.random.PRNGKey(0)
    k1, k2, k3 = jax.random.split(key, 3)

    # small shapes consistent with the module (channels fixed at 96 / 24)
    N, Cin, H, W = 2, 96, 16, 16
    Cout = 24

    x = jax.random.normal(k1, (N, Cin, H, W), jnp.float32) * 2.0

    # PyTorch-shape weights, deterministic init
    w_dw_oihw = jax.random.normal(k2, (Cin, 1, 3, 3), jnp.float32) * 0.2
    w_pw_oihw = jax.random.normal(k3, (Cout, Cin, 1, 1), jnp.float32) * 0.1
    g1 = 1.0 + 0.1 * jnp.cos(jnp.arange(Cin, dtype=jnp.float32))
    b1 = 0.05 * jnp.sin(jnp.arange(Cin, dtype=jnp.float32))
    g2 = 1.0 + 0.1 * jnp.cos(jnp.arange(Cout, dtype=jnp.float32))
    b2 = 0.05 * jnp.sin(jnp.arange(Cout, dtype=jnp.float32))

    # kernel-layout weights
    w_dw = jnp.transpose(w_dw_oihw[:, 0], (1, 2, 0))        # (3, 3, 96)
    w_pw = jnp.transpose(w_pw_oihw[:, :, 0, 0], (1, 0))     # (96, 24)

    fwd = jax.jit(model_forward)
    out = fwd(x, w_dw, w_pw, g1, b1, g2, b2)
    out = jax.block_until_ready(out)

    ref = reference_forward(x, w_dw_oihw, w_pw_oihw, g1, b1, g2, b2)
    assert out.shape == ref.shape == (N, Cout, H // 2, W // 2), (out.shape, ref.shape)
    max_err = float(jnp.max(jnp.abs(out - ref)))
    assert jnp.allclose(out, ref, atol=2e-3, rtol=2e-3), max_err

    print("KERNEL_OK")
</pallas_src>

<mosaic_0001>
module attributes {stable_mosaic.version = 11 : i64} {
  func.func @dw_conv_stats_kernel(%arg0: i32, %arg1: memref<1x9x9x128xf32, #tpu.memory_space<vmem>>, %arg2: memref<1x9x8x128xf32, #tpu.memory_space<vmem>>, %arg3: memref<1x8x9x128xf32, #tpu.memory_space<vmem>>, %arg4: memref<1x8x8x128xf32, #tpu.memory_space<vmem>>, %arg5: memref<3x3x128xf32, #tpu.memory_space<vmem>>, %arg6: memref<1x8x8x128xf32, #tpu.memory_space<vmem>>, %arg7: memref<8x128xf32, #tpu.memory_space<vmem>>, %arg8: memref<8x128xf32, #tpu.memory_space<vmem>>) attributes {dimension_semantics = [#tpu.dimension_semantics<parallel>], iteration_bounds = array<i64: 2>, scalar_prefetch = 0 : i64, scratch_operands = 0 : i64, tpu.core_type = #tpu.core_type<tc>, window_params = [{transform_indices = @transform_0, window_bounds = array<i64: 1, 9, 9, 128>}, {transform_indices = @transform_1, window_bounds = array<i64: 1, 9, 8, 128>}, {transform_indices = @transform_2, window_bounds = array<i64: 1, 8, 9, 128>}, {transform_indices = @transform_3, window_bounds = array<i64: 1, 8, 8, 128>}, {pipeline_mode = #tpu.pipeline_mode<synchronous>, transform_indices = @transform_4, window_bounds = array<i64: 3, 3, 128>}, {transform_indices = @transform_5, window_bounds = array<i64: 1, 8, 8, 128>}, {transform_indices = @transform_6, window_bounds = array<i64: 8, 128>}, {transform_indices = @transform_7, window_bounds = array<i64: 8, 128>}]} {
    %c0 = arith.constant 0 : index
    %c0_0 = arith.constant 0 : index
    %c0_1 = arith.constant 0 : index
    %c0_2 = arith.constant 0 : index
    %0 = vector.load %arg1[%c0, %c0_0, %c0_1, %c0_2] : memref<1x9x9x128xf32, #tpu.memory_space<vmem>>, vector<1x9x9x128xf32>
    %1 = vector.shape_cast %0 : vector<1x9x9x128xf32> to vector<9x9x128xf32>
    %cst = arith.constant 0.000000e+00 : f32
    %2 = vector.broadcast %cst : f32 to vector<9x9x128xf32>
    %3 = arith.maximumf %1, %2 : vector<9x9x128xf32>
    %cst_3 = arith.constant 6.000000e+00 : f32
    %4 = vector.broadcast %cst_3 : f32 to vector<9x9x128xf32>
    %5 = arith.minimumf %3, %4 : vector<9x9x128xf32>
    %c0_4 = arith.constant 0 : index
    %c0_5 = arith.constant 0 : index
    %c0_6 = arith.constant 0 : index
    %c0_7 = arith.constant 0 : index
    %6 = vector.load %arg2[%c0_4, %c0_5, %c0_6, %c0_7] : memref<1x9x8x128xf32, #tpu.memory_space<vmem>>, vector<1x9x8x128xf32>
    %7 = vector.shape_cast %6 : vector<1x9x8x128xf32> to vector<9x8x128xf32>
    %cst_8 = arith.constant 0.000000e+00 : f32
    %8 = vector.broadcast %cst_8 : f32 to vector<9x8x128xf32>
    %9 = arith.maximumf %7, %8 : vector<9x8x128xf32>
    %cst_9 = arith.constant 6.000000e+00 : f32
    %10 = vector.broadcast %cst_9 : f32 to vector<9x8x128xf32>
    %11 = arith.minimumf %9, %10 : vector<9x8x128xf32>
    %c0_10 = arith.constant 0 : index
    %c0_11 = arith.constant 0 : index
    %c0_12 = arith.constant 0 : index
    %c0_13 = arith.constant 0 : index
    %12 = vector.load %arg3[%c0_10, %c0_11, %c0_12, %c0_13] : memref<1x8x9x128xf32, #tpu.memory_space<vmem>>, vector<1x8x9x128xf32>
    %13 = vector.shape_cast %12 : vector<1x8x9x128xf32> to vector<8x9x128xf32>
    %cst_14 = arith.constant 0.000000e+00 : f32
    %14 = vector.broadcast %cst_14 : f32 to vector<8x9x128xf32>
    %15 = arith.maximumf %13, %14 : vector<8x9x128xf32>
    %cst_15 = arith.constant 6.000000e+00 : f32
    %16 = vector.broadcast %cst_15 : f32 to vector<8x9x128xf32>
    %17 = arith.minimumf %15, %16 : vector<8x9x128xf32>
    %c0_16 = arith.constant 0 : index
    %c0_17 = arith.constant 0 : index
    %c0_18 = arith.constant 0 : index
    %c0_19 = arith.constant 0 : index
    %18 = vector.load %arg4[%c0_16, %c0_17, %c0_18, %c0_19] : memref<1x8x8x128xf32, #tpu.memory_space<vmem>>, vector<1x8x8x128xf32>
    %19 = vector.shape_cast %18 : vector<1x8x8x128xf32> to vector<8x8x128xf32>
    %cst_20 = arith.constant 0.000000e+00 : f32
    %20 = vector.broadcast %cst_20 : f32 to vector<8x8x128xf32>
    %21 = arith.maximumf %19, %20 : vector<8x8x128xf32>
    %cst_21 = arith.constant 6.000000e+00 : f32
    %22 = vector.broadcast %cst_21 : f32 to vector<8x8x128xf32>
    %23 = arith.minimumf %21, %22 : vector<8x8x128xf32>
    %c0_22 = arith.constant 0 : index
    %c0_23 = arith.constant 0 : index
    %c0_24 = arith.constant 0 : index
    %24 = vector.load %arg5[%c0_22, %c0_23, %c0_24] : memref<3x3x128xf32, #tpu.memory_space<vmem>>, vector<3x3x128xf32>
    %cst_25 = arith.constant 0.000000e+00 : f32
    %25 = vector.broadcast %cst_25 : f32 to vector<8x8x128xf32>
    %26 = vector.extract_strided_slice %5 {offsets = [0, 0, 0], sizes = [8, 8, 128], strides = [1, 1, 1]} : vector<9x9x128xf32> to vector<8x8x128xf32>
    %27 = vector.extract_strided_slice %24 {offsets = [0, 0, 0], sizes = [1, 1, 128], strides = [1, 1, 1]} : vector<3x3x128xf32> to vector<1x1x128xf32>
    %28 = vector.shape_cast %27 : vector<1x1x128xf32> to vector<128xf32>
    %29 = vector.shape_cast %28 : vector<128xf32> to vector<1x1x128xf32>
    %30 = vector.broadcast %29 : vector<1x1x128xf32> to vector<8x8x128xf32>
    %31 = arith.mulf %26, %30 : vector<8x8x128xf32>
    %32 = arith.addf %25, %31 : vector<8x8x128xf32>
    %33 = vector.extract_strided_slice %11 {offsets = [0, 0, 0], sizes = [8, 8, 128], strides = [1, 1, 1]} : vector<9x8x128xf32> to vector<8x8x128xf32>
    %34 = vector.extract_strided_slice %24 {offsets = [0, 1, 0], sizes = [1, 1, 128], strides = [1, 1, 1]} : vector<3x3x128xf32> to vector<1x1x128xf32>
    %35 = vector.shape_cast %34 : vector<1x1x128xf32> to vector<128xf32>
    %36 = vector.shape_cast %35 : vector<128xf32> to vector<1x1x128xf32>
    %37 = vector.broadcast %36 : vector<1x1x128xf32> to vector<8x8x128xf32>
    %38 = arith.mulf %33, %37 : vector<8x8x128xf32>
    %39 = arith.addf %32, %38 : vector<8x8x128xf32>
    %40 = vector.extract_strided_slice %5 {offsets = [0, 1, 0], sizes = [8, 8, 128], strides = [1, 1, 1]} : vector<9x9x128xf32> to vector<8x8x128xf32>
    %41 = vector.extract_strided_slice %24 {offsets = [0, 2, 0], sizes = [1, 1, 128], strides = [1, 1, 1]} : vector<3x3x128xf32> to vector<1x1x128xf32>
    %42 = vector.shape_cast %41 : vector<1x1x128xf32> to vector<128xf32>
    %43 = vector.shape_cast %42 : vector<128xf32> to vector<1x1x128xf32>
    %44 = vector.broadcast %43 : vector<1x1x128xf32> to vector<8x8x128xf32>
    %45 = arith.mulf %40, %44 : vector<8x8x128xf32>
    %46 = arith.addf %39, %45 : vector<8x8x128xf32>
    %47 = vector.extract_strided_slice %17 {offsets = [0, 0, 0], sizes = [8, 8, 128], strides = [1, 1, 1]} : vector<8x9x128xf32> to vector<8x8x128xf32>
    %48 = vector.extract_strided_slice %24 {offsets = [1, 0, 0], sizes = [1, 1, 128], strides = [1, 1, 1]} : vector<3x3x128xf32> to vector<1x1x128xf32>
    %49 = vector.shape_cast %48 : vector<1x1x128xf32> to vector<128xf32>
    %50 = vector.shape_cast %49 : vector<128xf32> to vector<1x1x128xf32>
    %51 = vector.broadcast %50 : vector<1x1x128xf32> to vector<8x8x128xf32>
    %52 = arith.mulf %47, %51 : vector<8x8x128xf32>
    %53 = arith.addf %46, %52 : vector<8x8x128xf32>
    %54 = vector.extract_strided_slice %24 {offsets = [1, 1, 0], sizes = [1, 1, 128], strides = [1, 1, 1]} : vector<3x3x128xf32> to vector<1x1x128xf32>
    %55 = vector.shape_cast %54 : vector<1x1x128xf32> to vector<128xf32>
    %56 = vector.shape_cast %55 : vector<128xf32> to vector<1x1x128xf32>
    %57 = vector.broadcast %56 : vector<1x1x128xf32> to vector<8x8x128xf32>
    %58 = arith.mulf %23, %57 : vector<8x8x128xf32>
    %59 = arith.addf %53, %58 : vector<8x8x128xf32>
    %60 = vector.extract_strided_slice %17 {offsets = [0, 1, 0], sizes = [8, 8, 128], strides = [1, 1, 1]} : vector<8x9x128xf32> to vector<8x8x128xf32>
    %61 = vector.extract_strided_slice %24 {offsets = [1, 2, 0], sizes = [1, 1, 128], strides = [1, 1, 1]} : vector<3x3x128xf32> to vector<1x1x128xf32>
    %62 = vector.shape_cast %61 : vector<1x1x128xf32> to vector<128xf32>
    %63 = vector.shape_cast %62 : vector<128xf32> to vector<1x1x128xf32>
    %64 = vector.broadcast %63 : vector<1x1x128xf32> to vector<8x8x128xf32>
    %65 = arith.mulf %60, %64 : vector<8x8x128xf32>
    %66 = arith.addf %59, %65 : vector<8x8x128xf32>
    %67 = vector.extract_strided_slice %5 {offsets = [1, 0, 0], sizes = [8, 8, 128], strides = [1, 1, 1]} : vector<9x9x128xf32> to vector<8x8x128xf32>
    %68 = vector.extract_strided_slice %24 {offsets = [2, 0, 0], sizes = [1, 1, 128], strides = [1, 1, 1]} : vector<3x3x128xf32> to vector<1x1x128xf32>
    %69 = vector.shape_cast %68 : vector<1x1x128xf32> to vector<128xf32>
    %70 = vector.shape_cast %69 : vector<128xf32> to vector<1x1x128xf32>
    %71 = vector.broadcast %70 : vector<1x1x128xf32> to vector<8x8x128xf32>
    %72 = arith.mulf %67, %71 : vector<8x8x128xf32>
    %73 = arith.addf %66, %72 : vector<8x8x128xf32>
    %74 = vector.extract_strided_slice %11 {offsets = [1, 0, 0], sizes = [8, 8, 128], strides = [1, 1, 1]} : vector<9x8x128xf32> to vector<8x8x128xf32>
    %75 = vector.extract_strided_slice %24 {offsets = [2, 1, 0], sizes = [1, 1, 128], strides = [1, 1, 1]} : vector<3x3x128xf32> to vector<1x1x128xf32>
    %76 = vector.shape_cast %75 : vector<1x1x128xf32> to vector<128xf32>
    %77 = vector.shape_cast %76 : vector<128xf32> to vector<1x1x128xf32>
    %78 = vector.broadcast %77 : vector<1x1x128xf32> to vector<8x8x128xf32>
    %79 = arith.mulf %74, %78 : vector<8x8x128xf32>
    %80 = arith.addf %73, %79 : vector<8x8x128xf32>
    %81 = vector.extract_strided_slice %5 {offsets = [1, 1, 0], sizes = [8, 8, 128], strides = [1, 1, 1]} : vector<9x9x128xf32> to vector<8x8x128xf32>
    %82 = vector.extract_strided_slice %24 {offsets = [2, 2, 0], sizes = [1, 1, 128], strides = [1, 1, 1]} : vector<3x3x128xf32> to vector<1x1x128xf32>
    %83 = vector.shape_cast %82 : vector<1x1x128xf32> to vector<128xf32>
    %84 = vector.shape_cast %83 : vector<128xf32> to vector<1x1x128xf32>
    %85 = vector.broadcast %84 : vector<1x1x128xf32> to vector<8x8x128xf32>
    %86 = arith.mulf %81, %85 : vector<8x8x128xf32>
    %87 = arith.addf %80, %86 : vector<8x8x128xf32>
    %c0_26 = arith.constant 0 : index
    %c0_27 = arith.constant 0 : index
    %c0_28 = arith.constant 0 : index
    %c0_29 = arith.constant 0 : index
    %88 = vector.load %arg6[%c0_26, %c0_27, %c0_28, %c0_29] : memref<1x8x8x128xf32, #tpu.memory_space<vmem>>, vector<1x8x8x128xf32>
    %89 = vector.shape_cast %88 : vector<1x8x8x128xf32> to vector<8x8x128xf32>
    %90 = vector.shape_cast %87 : vector<8x8x128xf32> to vector<1x8x8x128xf32>
    tpu.vector_store %arg6[%c0_26, %c0_27, %c0_28, %c0_29], %90 {strides = array<i32>} : memref<1x8x8x128xf32, #tpu.memory_space<vmem>>, vector<1x8x8x128xf32>,
    %cst_30 = arith.constant dense<0.000000e+00> : vector<8x128xf32>
    %91 = vector.multi_reduction <add>, %87, %cst_30 [0] : vector<8x8x128xf32> to vector<8x128xf32>
    %cst_31 = arith.constant dense<0.000000e+00> : vector<128xf32>
    %92 = vector.multi_reduction <add>, %91, %cst_31 [0] : vector<8x128xf32> to vector<128xf32>
    %93 = vector.shape_cast %92 : vector<128xf32> to vector<1x128xf32>
    %94 = arith.mulf %87, %87 : vector<8x8x128xf32>
    %cst_32 = arith.constant dense<0.000000e+00> : vector<8x128xf32>
    %95 = vector.multi_reduction <add>, %94, %cst_32 [0] : vector<8x8x128xf32> to vector<8x128xf32>
    %cst_33 = arith.constant dense<0.000000e+00> : vector<128xf32>
    %96 = vector.multi_reduction <add>, %95, %cst_33 [0] : vector<8x128xf32> to vector<128xf32>
    %97 = vector.shape_cast %96 : vector<128xf32> to vector<1x128xf32>
    %98 = vector.shape_cast %93 : vector<1x128xf32> to vector<1x128xf32>
    %99 = vector.broadcast %98 : vector<1x128xf32> to vector<8x128xf32>
    %c0_34 = arith.constant 0 : index
    %c0_35 = arith.constant 0 : index
    %100 = vector.load %arg7[%c0_34, %c0_35] : memref<8x128xf32, #tpu.memory_space<vmem>>, vector<8x128xf32>
    tpu.vector_store %arg7[%c0_34, %c0_35], %99 {strides = array<i32>} : memref<8x128xf32, #tpu.memory_space<vmem>>, vector<8x128xf32>,
    %101 = vector.shape_cast %97 : vector<1x128xf32> to vector<1x128xf32>
    %102 = vector.broadcast %101 : vector<1x128xf32> to vector<8x128xf32>
    %c0_36 = arith.constant 0 : index
    %c0_37 = arith.constant 0 : index
    %103 = vector.load %arg8[%c0_36, %c0_37] : memref<8x128xf32, #tpu.memory_space<vmem>>, vector<8x128xf32>
    tpu.vector_store %arg8[%c0_36, %c0_37], %102 {strides = array<i32>} : memref<8x128xf32, #tpu.memory_space<vmem>>, vector<8x128xf32>,
    return
  }
  func.func @transform_0(%arg0: i32) -> (i32, i32, i32, i32) {
    %c0_i32 = arith.constant 0 : i32
    %c0_i32_0 = arith.constant 0 : i32
    %c0_i32_1 = arith.constant 0 : i32
    %c0_i32_2 = arith.constant 0 : i32
    return %arg0, %c0_i32, %c0_i32_0, %c0_i32_1 : i32, i32, i32, i32
  }
  func.func @transform_1(%arg0: i32) -> (i32, i32, i32, i32) {
    %c0_i32 = arith.constant 0 : i32
    %c0_i32_0 = arith.constant 0 : i32
    %c0_i32_1 = arith.constant 0 : i32
    %c0_i32_2 = arith.constant 0 : i32
    return %arg0, %c0_i32, %c0_i32_0, %c0_i32_1 : i32, i32, i32, i32
  }
  func.func @transform_2(%arg0: i32) -> (i32, i32, i32, i32) {
    %c0_i32 = arith.constant 0 : i32
    %c0_i32_0 = arith.constant 0 : i32
    %c0_i32_1 = arith.constant 0 : i32
    %c0_i32_2 = arith.constant 0 : i32
    return %arg0, %c0_i32, %c0_i32_0, %c0_i32_1 : i32, i32, i32, i32
  }
  func.func @transform_3(%arg0: i32) -> (i32, i32, i32, i32) {
    %c0_i32 = arith.constant 0 : i32
    %c0_i32_0 = arith.constant 0 : i32
    %c0_i32_1 = arith.constant 0 : i32
    %c0_i32_2 = arith.constant 0 : i32
    return %arg0, %c0_i32, %c0_i32_0, %c0_i32_1 : i32, i32, i32, i32
  }
  func.func @transform_4(%arg0: i32) -> (i32, i32, i32) {
    %c0_i32 = arith.constant 0 : i32
    %c0_i32_0 = arith.constant 0 : i32
    %c0_i32_1 = arith.constant 0 : i32
    %c0_i32_2 = arith.constant 0 : i32
    return %c0_i32, %c0_i32_0, %c0_i32_1 : i32, i32, i32
  }
  func.func @transform_5(%arg0: i32) -> (i32, i32, i32, i32) {
    %c0_i32 = arith.constant 0 : i32
    %c0_i32_0 = arith.constant 0 : i32
    %c0_i32_1 = arith.constant 0 : i32
    %c0_i32_2 = arith.constant 0 : i32
    return %arg0, %c0_i32, %c0_i32_0, %c0_i32_1 : i32, i32, i32, i32
  }
  func.func @transform_6(%arg0: i32) -> (i32, i32) {
    %c0_i32 = arith.constant 0 : i32
    %c0_i32_0 = arith.constant 0 : i32
    return %arg0, %c0_i32 : i32, i32
  }
  func.func @transform_7(%arg0: i32) -> (i32, i32) {
    %c0_i32 = arith.constant 0 : i32
    %c0_i32_0 = arith.constant 0 : i32
    return %arg0, %c0_i32 : i32, i32
  }
}

module attributes {stable_mosaic.version = 11 : i64} {
  func.func @bn_relu6_matmul_stats_kernel(%arg0: i32, %arg1: memref<128x128xf32, #tpu.memory_space<vmem>>, %arg2: memref<1x128xf32, #tpu.memory_space<vmem>>, %arg3: memref<1x128xf32, #tpu.memory_space<vmem>>, %arg4: memref<128x128xf32, #tpu.memory_space<vmem>>, %arg5: memref<128x128xf32, #tpu.memory_space<vmem>>, %arg6: memref<8x128xf32, #tpu.memory_space<vmem>>, %arg7: memref<8x128xf32, #tpu.memory_space<vmem>>) attributes {dimension_semantics = [#tpu.dimension_semantics<parallel>], iteration_bounds = array<i64: 1>, scalar_prefetch = 0 : i64, scratch_operands = 0 : i64, tpu.core_type = #tpu.core_type<tc>, window_params = [{transform_indices = @transform_0, window_bounds = array<i64: 128, 128>}, {pipeline_mode = #tpu.pipeline_mode<synchronous>, transform_indices = @transform_1, window_bounds = array<i64: 1, 128>}, {pipeline_mode = #tpu.pipeline_mode<synchronous>, transform_indices = @transform_2, window_bounds = array<i64: 1, 128>}, {pipeline_mode = #tpu.pipeline_mode<synchronous>, transform_indices = @transform_3, window_bounds = array<i64: 128, 128>}, {transform_indices = @transform_4, window_bounds = array<i64: 128, 128>}, {transform_indices = @transform_5, window_bounds = array<i64: 8, 128>}, {transform_indices = @transform_6, window_bounds = array<i64: 8, 128>}]} {
    %c0 = arith.constant 0 : index
    %c0_0 = arith.constant 0 : index
    %0 = vector.load %arg1[%c0, %c0_0] : memref<128x128xf32, #tpu.memory_space<vmem>>, vector<128x128xf32>
    %c0_1 = arith.constant 0 : index
    %c0_2 = arith.constant 0 : index
    %1 = vector.load %arg2[%c0_1, %c0_2] : memref<1x128xf32, #tpu.memory_space<vmem>>, vector<1x128xf32>
    %2 = vector.broadcast %1 : vector<1x128xf32> to vector<128x128xf32>
    %3 = arith.mulf %0, %2 : vector<128x128xf32>
    %c0_3 = arith.constant 0 : index
    %c0_4 = arith.constant 0 : index
    %4 = vector.load %arg3[%c0_3, %c0_4] : memref<1x128xf32, #tpu.memory_space<vmem>>, vector<1x128xf32>
    %5 = vector.broadcast %4 : vector<1x128xf32> to vector<128x128xf32>
    %6 = arith.addf %3, %5 : vector<128x128xf32>
    %cst = arith.constant 0.000000e+00 : f32
    %7 = vector.broadcast %cst : f32 to vector<128x128xf32>
    %8 = arith.maximumf %6, %7 : vector<128x128xf32>
    %cst_5 = arith.constant 6.000000e+00 : f32
    %9 = vector.broadcast %cst_5 : f32 to vector<128x128xf32>
    %10 = arith.minimumf %8, %9 : vector<128x128xf32>
    %c0_6 = arith.constant 0 : index
    %c0_7 = arith.constant 0 : index
    %11 = vector.load %arg4[%c0_6, %c0_7] : memref<128x128xf32, #tpu.memory_space<vmem>>, vector<128x128xf32>
    %cst_8 = arith.constant dense<0.000000e+00> : vector<128x128xf32>
    %12 = tpu.matmul %10, %11, %cst_8 {dimension_numbers = #tpu.dot_dimension_numbers<[1], [0], [0], [1], [0, 0, 1, 1], [], []>} : vector<128x128xf32>, vector<128x128xf32>, vector<128x128xf32> -> vector<128x128xf32>
    %c0_9 = arith.constant 0 : index
    %c0_10 = arith.constant 0 : index
    %13 = vector.load %arg5[%c0_9, %c0_10] : memref<128x128xf32, #tpu.memory_space<vmem>>, vector<128x128xf32>
    tpu.vector_store %arg5[%c0_9, %c0_10], %12 {strides = array<i32>} : memref<128x128xf32, #tpu.memory_space<vmem>>, vector<128x128xf32>,
    %cst_11 = arith.constant dense<0.000000e+00> : vector<128xf32>
    %14 = vector.multi_reduction <add>, %12, %cst_11 [0] : vector<128x128xf32> to vector<128xf32>
    %15 = vector.shape_cast %14 : vector<128xf32> to vector<1x128xf32>
    %16 = vector.shape_cast %15 : vector<1x128xf32> to vector<1x128xf32>
    %17 = vector.broadcast %16 : vector<1x128xf32> to vector<8x128xf32>
    %c0_12 = arith.constant 0 : index
    %c0_13 = arith.constant 0 : index
    %18 = vector.load %arg6[%c0_12, %c0_13] : memref<8x128xf32, #tpu.memory_space<vmem>>, vector<8x128xf32>
    tpu.vector_store %arg6[%c0_12, %c0_13], %17 {strides = array<i32>} : memref<8x128xf32, #tpu.memory_space<vmem>>, vector<8x128xf32>,
    %19 = arith.mulf %12, %12 : vector<128x128xf32>
    %cst_14 = arith.constant dense<0.000000e+00> : vector<128xf32>
    %20 = vector.multi_reduction <add>, %19, %cst_14 [0] : vector<128x128xf32> to vector<128xf32>
    %21 = vector.shape_cast %20 : vector<128xf32> to vector<1x128xf32>
    %22 = vector.shape_cast %21 : vector<1x128xf32> to vector<1x128xf32>
    %23 = vector.broadcast %22 : vector<1x128xf32> to vector<8x128xf32>
    %c0_15 = arith.constant 0 : index
    %c0_16 = arith.constant 0 : index
    %24 = vector.load %arg7[%c0_15, %c0_16] : memref<8x128xf32, #tpu.memory_space<vmem>>, vector<8x128xf32>
    tpu.vector_store %arg7[%c0_15, %c0_16], %23 {strides = array<i32>} : memref<8x128xf32, #tpu.memory_space<vmem>>, vector<8x128xf32>,
    return
  }
  func.func @transform_0(%arg0: i32) -> (i32, i32) {
    %c0_i32 = arith.constant 0 : i32
    %c0_i32_0 = arith.constant 0 : i32
    return %arg0, %c0_i32 : i32, i32
  }
  func.func @transform_1(%arg0: i32) -> (i32, i32) {
    %c0_i32 = arith.constant 0 : i32
    %c0_i32_0 = arith.constant 0 : i32
    %c0_i32_1 = arith.constant 0 : i32
    return %c0_i32, %c0_i32_0 : i32, i32
  }
  func.func @transform_2(%arg0: i32) -> (i32, i32) {
    %c0_i32 = arith.constant 0 : i32
    %c0_i32_0 = arith.constant 0 : i32
    %c0_i32_1 = arith.constant 0 : i32
    return %c0_i32, %c0_i32_0 : i32, i32
  }
  func.func @transform_3(%arg0: i32) -> (i32, i32) {
    %c0_i32 = arith.constant 0 : i32
    %c0_i32_0 = arith.constant 0 : i32
    %c0_i32_1 = arith.constant 0 : i32
    return %c0_i32, %c0_i32_0 : i32, i32
  }
  func.func @transform_4(%arg0: i32) -> (i32, i32) {
    %c0_i32 = arith.constant 0 : i32
    %c0_i32_0 = arith.constant 0 : i32
    return %arg0, %c0_i32 : i32, i32
  }
  func.func @transform_5(%arg0: i32) -> (i32, i32) {
    %c0_i32 = arith.constant 0 : i32
    %c0_i32_0 = arith.constant 0 : i32
    return %arg0, %c0_i32 : i32, i32
  }
  func.func @transform_6(%arg0: i32) -> (i32, i32) {
    %c0_i32 = arith.constant 0 : i32
    %c0_i32_0 = arith.constant 0 : i32
    return %arg0, %c0_i32 : i32, i32
  }
}

module attributes {stable_mosaic.version = 11 : i64} {
  func.func @bn_apply_kernel(%arg0: i32, %arg1: memref<128x128xf32, #tpu.memory_space<vmem>>, %arg2: memref<1x128xf32, #tpu.memory_space<vmem>>, %arg3: memref<1x128xf32, #tpu.memory_space<vmem>>, %arg4: memref<128x128xf32, #tpu.memory_space<vmem>>) attributes {dimension_semantics = [#tpu.dimension_semantics<parallel>], iteration_bounds = array<i64: 1>, scalar_prefetch = 0 : i64, scratch_operands = 0 : i64, tpu.core_type = #tpu.core_type<tc>, window_params = [{transform_indices = @transform_0, window_bounds = array<i64: 128, 128>}, {pipeline_mode = #tpu.pipeline_mode<synchronous>, transform_indices = @transform_1, window_bounds = array<i64: 1, 128>}, {pipeline_mode = #tpu.pipeline_mode<synchronous>, transform_indices = @transform_2, window_bounds = array<i64: 1, 128>}, {transform_indices = @transform_3, window_bounds = array<i64: 128, 128>}]} {
    %c0 = arith.constant 0 : index
    %c0_0 = arith.constant 0 : index
    %0 = vector.load %arg1[%c0, %c0_0] : memref<128x128xf32, #tpu.memory_space<vmem>>, vector<128x128xf32>
    %c0_1 = arith.constant 0 : index
    %c0_2 = arith.constant 0 : index
    %1 = vector.load %arg2[%c0_1, %c0_2] : memref<1x128xf32, #tpu.memory_space<vmem>>, vector<1x128xf32>
    %2 = vector.broadcast %1 : vector<1x128xf32> to vector<128x128xf32>
    %3 = arith.mulf %0, %2 : vector<128x128xf32>
    %c0_3 = arith.constant 0 : index
    %c0_4 = arith.constant 0 : index
    %4 = vector.load %arg3[%c0_3, %c0_4] : memref<1x128xf32, #tpu.memory_space<vmem>>, vector<1x128xf32>
    %5 = vector.broadcast %4 : vector<1x128xf32> to vector<128x128xf32>
    %6 = arith.addf %3, %5 : vector<128x128xf32>
    %c0_5 = arith.constant 0 : index
    %c0_6 = arith.constant 0 : index
    %7 = vector.load %arg4[%c0_5, %c0_6] : memref<128x128xf32, #tpu.memory_space<vmem>>, vector<128x128xf32>
    tpu.vector_store %arg4[%c0_5, %c0_6], %6 {strides = array<i32>} : memref<128x128xf32, #tpu.memory_space<vmem>>, vector<128x128xf32>,
    return
  }
  func.func @transform_0(%arg0: i32) -> (i32, i32) {
    %c0_i32 = arith.constant 0 : i32
    %c0_i32_0 = arith.constant 0 : i32
    return %arg0, %c0_i32 : i32, i32
  }
  func.func @transform_1(%arg0: i32) -> (i32, i32) {
    %c0_i32 = arith.constant 0 : i32
    %c0_i32_0 = arith.constant 0 : i32
    %c0_i32_1 = arith.constant 0 : i32
    return %c0_i32, %c0_i32_0 : i32, i32
  }
  func.func @transform_2(%arg0: i32) -> (i32, i32) {
    %c0_i32 = arith.constant 0 : i32
    %c0_i32_0 = arith.constant 0 : i32
    %c0_i32_1 = arith.constant 0 : i32
    return %c0_i32, %c0_i32_0 : i32, i32
  }
  func.func @transform_3(%arg0: i32) -> (i32, i32) {
    %c0_i32 = arith.constant 0 : i32
    %c0_i32_0 = arith.constant 0 : i32
    return %arg0, %c0_i32 : i32, i32
  }
}

</mosaic_0001>

<llo_original>
// kernel: model_forward.5
$region0: #{model_forward.5}
  #allocation0 [shape = 'u32[]', space=smem, size = 0x4, offset = 0x4, fixed_abs, tag = 'smem constant byte address 0x4 - core index']
  #allocation1 [shape = 'u32[144,128]{1,0:T(1,128)}', space=vmem, size = 0x12000, scoped, tag = 'internal scratch']
  %s0 = inlined_call_operand.vmem [shape: f32[128,128], index: 0, kind: input, shape index: {}]
  %s1 = inlined_call_operand.vmem [shape: f32[1,128], index: 1, kind: input, shape index: {}]
  %s2 = inlined_call_operand.vmem [shape: f32[1,128], index: 2, kind: input, shape index: {}]
  %s3 = inlined_call_operand.hbm [shape: f32[128,128], index: 3, kind: output, shape index: {}]
  %s4 = sld [smem:[#allocation0]]
  $region22: #{model_forward.5} parent=0
    _
  %s6 = ssub.s32 1, %s4
  %s7 = scalar_select 0, %s6, %s4
  $region1: #{model_forward.5} parent=0
    #allocation2 [shape = 'u8[65536]{0}', space=vmem, size = 0x10000, scoped, tag = 'output window, operand 0, single buffered']
    #allocation3 [shape = 's32[1]{0}', space=sflag, size = 0x4, scoped, tag = 'scoped memory for model_forward.5']
    %8 = vsyncpa [#allocation3], 0
    // Predicated region
    $region2: #{model_forward.5} parent=1 // pred_check
      _
    $region3: #{model_forward.5} parent=1 // pred_check_branch
      %10 = sbr.rel (0) target = $region5
    $region4: #{model_forward.5} parent=1 // pred_region
      _
    $region5: #{model_forward.5} parent=1 // pred_fallthru
      _
    // Predicated region
    $region6: #{model_forward.5} parent=1 // pred_check
      _
    $region7: #{model_forward.5} parent=1 // pred_check_branch
      %12 = sbr.rel (0) target = $region9
    $region8: #{model_forward.5} parent=1 // pred_region
      _
    $region9: #{model_forward.5} parent=1 // pred_fallthru
      _
    // Predicated region
    $region10: #{model_forward.5} parent=1 // pred_check
      _
    $region11: #{model_forward.5} parent=1 // pred_check_branch
      %14 = sbr.rel (0) target = $region13
    $region12: #{model_forward.5} parent=1 // pred_region
      _
    $region13: #{model_forward.5} parent=1 // pred_fallthru
      _
    %v15 = vld [vmem:[%s0] sm:$0xff]
    %v16 = vld [vmem:[%s0 + $0x8] sm:$0xff]
    %v17 = vld [vmem:[%s0 + $0x10] sm:$0xff]
    %v18 = vld [vmem:[%s0 + $0x18] sm:$0xff]
    %v19 = vld [vmem:[%s0 + $0x20] sm:$0xff]
    %v20 = vld [vmem:[%s0 + $0x28] sm:$0xff]
    %v21 = vld [vmem:[%s0 + $0x30] sm:$0xff]
    %v22 = vld [vmem:[%s0 + $0x38] sm:$0xff]
    %v23 = vld [vmem:[%s0 + $0x40] sm:$0xff]
    %v24 = vld [vmem:[%s0 + $0x48] sm:$0xff]
    %v25 = vld [vmem:[%s0 + $0x50] sm:$0xff]
    %v26 = vld [vmem:[%s0 + $0x58] sm:$0xff]
    %v27 = vld [vmem:[%s0 + $0x60] sm:$0xff]
    %v28 = vld [vmem:[%s0 + $0x68] sm:$0xff]
    %v29 = vld [vmem:[%s0 + $0x70] sm:$0xff]
    %v30 = vld [vmem:[%s0 + $0x78] sm:$0xff]
    %v31 = vld [vmem:[%s1] sm:$0x1]
    %v33 = vlaneseq
    %v34 = vshrl.u32 %v33, 7
    %v35 = vsub.s32 0, %v34
    %v36 = vrot.slane %v31, %v35
    %v38 = vmul.f32 %v15, %v36
    %v39 = vmul.f32 %v16, %v36
    %v40 = vmul.f32 %v17, %v36
    %v41 = vmul.f32 %v18, %v36
    %v42 = vmul.f32 %v19, %v36
    %v43 = vmul.f32 %v20, %v36
    %v44 = vmul.f32 %v21, %v36
    %v45 = vmul.f32 %v22, %v36
    %v46 = vmul.f32 %v23, %v36
    %v47 = vmul.f32 %v24, %v36
    %v48 = vmul.f32 %v25, %v36
    %v49 = vmul.f32 %v26, %v36
    %v50 = vmul.f32 %v27, %v36
    %v51 = vmul.f32 %v28, %v36
    %v52 = vmul.f32 %v29, %v36
    %v53 = vmul.f32 %v30, %v36
    %v54 = vld [vmem:[%s2] sm:$0x1]
    %v56 = vlaneseq
    %v57 = vshrl.u32 %v56, 7
    %v58 = vsub.s32 0, %v57
    %v59 = vrot.slane %v54, %v58
    %v61 = vadd.f32 %v38, %v59
    %v62 = vadd.f32 %v39, %v59
    %v63 = vadd.f32 %v40, %v59
    %v64 = vadd.f32 %v41, %v59
    %v65 = vadd.f32 %v42, %v59
    %v66 = vadd.f32 %v43, %v59
    %v67 = vadd.f32 %v44, %v59
    %v68 = vadd.f32 %v45, %v59
    %v69 = vadd.f32 %v46, %v59
    %v70 = vadd.f32 %v47, %v59
    %v71 = vadd.f32 %v48, %v59
    %v72 = vadd.f32 %v49, %v59
    %v73 = vadd.f32 %v50, %v59
    %v74 = vadd.f32 %v51, %v59
    %v75 = vadd.f32 %v52, %v59
    %v76 = vadd.f32 %v53, %v59
    %77 = vst [vmem:[#allocation2] sm:$0xff] %v61
    %78 = vst [vmem:[#allocation2 + $0x8] sm:$0xff] %v62
    %79 = vst [vmem:[#allocation2 + $0x10] sm:$0xff] %v63
    %80 = vst [vmem:[#allocation2 + $0x18] sm:$0xff] %v64
    %81 = vst [vmem:[#allocation2 + $0x20] sm:$0xff] %v65
    %82 = vst [vmem:[#allocation2 + $0x28] sm:$0xff] %v66
    %83 = vst [vmem:[#allocation2 + $0x30] sm:$0xff] %v67
    %84 = vst [vmem:[#allocation2 + $0x38] sm:$0xff] %v68
    %85 = vst [vmem:[#allocation2 + $0x40] sm:$0xff] %v69
    %86 = vst [vmem:[#allocation2 + $0x48] sm:$0xff] %v70
    %87 = vst [vmem:[#allocation2 + $0x50] sm:$0xff] %v71
    %88 = vst [vmem:[#allocation2 + $0x58] sm:$0xff] %v72
    %89 = vst [vmem:[#allocation2 + $0x60] sm:$0xff] %v73
    %90 = vst [vmem:[#allocation2 + $0x68] sm:$0xff] %v74
    %91 = vst [vmem:[#allocation2 + $0x70] sm:$0xff] %v75
    %92 = vst [vmem:[#allocation2 + $0x78] sm:$0xff] %v76
    // Predicated region
    $region14: #{model_forward.5} parent=1 // pred_check
      _
    $region15: #{model_forward.5} parent=1 // pred_check_branch
      %94 = sbr.rel (0) target = $region17
    $region16: #{model_forward.5} parent=1 // pred_region
      %s96 = ssub.s32 2048, 2048
      %97 = vsyncadd [#allocation3], %s96
      %s98 = sshll.u32 [#allocation2], 4
      %s99 = int_to_ptr.vmem [resolvable:$true] %s98
      %104 = dma.vmem_to_hbm [thread:$0]  %s99, 2048, %s3, [#allocation3], 128, 128, 8
    $region17: #{model_forward.5} parent=1 // pred_fallthru
      _
    // Predicated region
    $region18: #{model_forward.5} parent=1 // pred_check
      _
    $region19: #{model_forward.5} parent=1 // pred_check_branch
      %106 = sbr.rel (0) target = $region21
    $region20: #{model_forward.5} parent=1 // pred_region
      %107 = dma.done [#allocation3], 2048
    $region21: #{model_forward.5} parent=1 // pred_fallthru
      _
    %108 = vsyncpa [#allocation3], 1

// kernel: model_forward.4
$region0: #{model_forward.4}
  #allocation0 [shape = 'u32[]', space=smem, size = 0x4, offset = 0x4, fixed_abs, tag = 'smem constant byte address 0x4 - core index']
  #allocation1 [shape = 'u32[144,128]{1,0:T(1,128)}', space=vmem, size = 0x12000, scoped, tag = 'internal scratch']
  %s0 = inlined_call_operand.vmem [shape: f32[128,128], index: 0, kind: input, shape index: {}]
  %s1 = inlined_call_operand.vmem [shape: f32[1,128], index: 1, kind: input, shape index: {}]
  %s2 = inlined_call_operand.vmem [shape: f32[1,128], index: 2, kind: input, shape index: {}]
  %s3 = inlined_call_operand.vmem [shape: f32[128,128], index: 3, kind: input, shape index: {}]
  %s4 = inlined_call_operand.vmem [shape: f32[128,128], index: 4, kind: output, shape index: {0}]
  %s5 = inlined_call_operand.vmem [shape: f32[8,128], index: 5, kind: output, shape index: {1}]
  %s6 = inlined_call_operand.vmem [shape: f32[8,128], index: 6, kind: output, shape index: {2}]
  %7 = xla_tuple %s4, %s5, %s6
  %s8 = sld [smem:[#allocation0]]
  $region42: #{model_forward.4} parent=0
    _
  %s10 = ssub.s32 1, %s8
  %s11 = scalar_select 0, %s10, %s8
  // Predicated region
  $region2: #{model_forward.4} parent=0 // pred_check
    _
  $region3: #{model_forward.4} parent=0 // pred_check_branch
    %13 = sbr.rel (0) target = $region5
  $region4: #{model_forward.4} parent=0 // pred_region
    _
  $region5: #{model_forward.4} parent=0 // pred_fallthru
    _
  // Predicated region
  $region6: #{model_forward.4} parent=0 // pred_check
    _
  $region7: #{model_forward.4} parent=0 // pred_check_branch
    %15 = sbr.rel (0) target = $region9
  $region8: #{model_forward.4} parent=0 // pred_region
    _
  $region9: #{model_forward.4} parent=0 // pred_fallthru
    _
  // Predicated region
  $region10: #{model_forward.4} parent=0 // pred_check
    _
  $region11: #{model_forward.4} parent=0 // pred_check_branch
    %17 = sbr.rel (0) target = $region13
  $region12: #{model_forward.4} parent=0 // pred_region
    _
  $region13: #{model_forward.4} parent=0 // pred_fallthru
    _
  // Predicated region
  $region14: #{model_forward.4} parent=0 // pred_check
    _
  $region15: #{model_forward.4} parent=0 // pred_check_branch
    %19 = sbr.rel (0) target = $region17
  $region16: #{model_forward.4} parent=0 // pred_region
    _
  $region17: #{model_forward.4} parent=0 // pred_fallthru
    _
  %v20 = vld [vmem:[%s0] sm:$0xff]
  %v21 = vld [vmem:[%s0 + $0x8] sm:$0xff]
  %v22 = vld [vmem:[%s0 + $0x10] sm:$0xff]
  %v23 = vld [vmem:[%s0 + $0x18] sm:$0xff]
  %v24 = vld [vmem:[%s0 + $0x20] sm:$0xff]
  %v25 = vld [vmem:[%s0 + $0x28] sm:$0xff]
  %v26 = vld [vmem:[%s0 + $0x30] sm:$0xff]
  %v27 = vld [vmem:[%s0 + $0x38] sm:$0xff]
  %v28 = vld [vmem:[%s0 + $0x40] sm:$0xff]
  %v29 = vld [vmem:[%s0 + $0x48] sm:$0xff]
  %v30 = vld [vmem:[%s0 + $0x50] sm:$0xff]
  %v31 = vld [vmem:[%s0 + $0x58] sm:$0xff]
  %v32 = vld [vmem:[%s0 + $0x60] sm:$0xff]
  %v33 = vld [vmem:[%s0 + $0x68] sm:$0xff]
  %v34 = vld [vmem:[%s0 + $0x70] sm:$0xff]
  %v35 = vld [vmem:[%s0 + $0x78] sm:$0xff]
  %v36 = vld [vmem:[%s1] sm:$0x1]
  %v38 = vlaneseq
  %v39 = vshrl.u32 %v38, 7
  %v40 = vsub.s32 0, %v39
  %v41 = vrot.slane %v36, %v40
  %v43 = vmul.f32 %v20, %v41
  %v44 = vmul.f32 %v21, %v41
  %v45 = vmul.f32 %v22, %v41
  %v46 = vmul.f32 %v23, %v41
  %v47 = vmul.f32 %v24, %v41
  %v48 = vmul.f32 %v25, %v41
  %v49 = vmul.f32 %v26, %v41
  %v50 = vmul.f32 %v27, %v41
  %v51 = vmul.f32 %v28, %v41
  %v52 = vmul.f32 %v29, %v41
  %v53 = vmul.f32 %v30, %v41
  %v54 = vmul.f32 %v31, %v41
  %v55 = vmul.f32 %v32, %v41
  %v56 = vmul.f32 %v33, %v41
  %v57 = vmul.f32 %v34, %v41
  %v58 = vmul.f32 %v35, %v41
  %v59 = vld [vmem:[%s2] sm:$0x1]
  %v61 = vlaneseq
  %v62 = vshrl.u32 %v61, 7
  %v63 = vsub.s32 0, %v62
  %v64 = vrot.slane %v59, %v63
  %v66 = vadd.f32 %v43, %v64
  %v67 = vadd.f32 %v44, %v64
  %v68 = vadd.f32 %v45, %v64
  %v69 = vadd.f32 %v46, %v64
  %v70 = vadd.f32 %v47, %v64
  %v71 = vadd.f32 %v48, %v64
  %v72 = vadd.f32 %v49, %v64
  %v73 = vadd.f32 %v50, %v64
  %v74 = vadd.f32 %v51, %v64
  %v75 = vadd.f32 %v52, %v64
  %v76 = vadd.f32 %v53, %v64
  %v77 = vadd.f32 %v54, %v64
  %v78 = vadd.f32 %v55, %v64
  %v79 = vadd.f32 %v56, %v64
  %v80 = vadd.f32 %v57, %v64
  %v81 = vadd.f32 %v58, %v64
  %v82 = vmax.f32 %v66, 0.0
  %v83 = vmax.f32 %v67, 0.0
  %v84 = vmax.f32 %v68, 0.0
  %v85 = vmax.f32 %v69, 0.0
  %v86 = vmax.f32 %v70, 0.0
  %v87 = vmax.f32 %v71, 0.0
  %v88 = vmax.f32 %v72, 0.0
  %v89 = vmax.f32 %v73, 0.0
  %v90 = vmax.f32 %v74, 0.0
  %v91 = vmax.f32 %v75, 0.0
  %v92 = vmax.f32 %v76, 0.0
  %v93 = vmax.f32 %v77, 0.0
  %v94 = vmax.f32 %v78, 0.0
  %v95 = vmax.f32 %v79, 0.0
  %v96 = vmax.f32 %v80, 0.0
  %v97 = vmax.f32 %v81, 0.0
  %v98 = vmin.f32 %v82, 6.0
  %v99 = vmin.f32 %v83, 6.0
  %v100 = vmin.f32 %v84, 6.0
  %v101 = vmin.f32 %v85, 6.0
  %v102 = vmin.f32 %v86, 6.0
  %v103 = vmin.f32 %v87, 6.0
  %v104 = vmin.f32 %v88, 6.0
  %v105 = vmin.f32 %v89, 6.0
  %v106 = vmin.f32 %v90, 6.0
  %v107 = vmin.f32 %v91, 6.0
  %v108 = vmin.f32 %v92, 6.0
  %v109 = vmin.f32 %v93, 6.0
  %v110 = vmin.f32 %v94, 6.0
  %v111 = vmin.f32 %v95, 6.0
  %v112 = vmin.f32 %v96, 6.0
  %v113 = vmin.f32 %v97, 6.0
  %v114 = vld [vmem:[%s3] sm:$0xff]
  %v115 = vld [vmem:[%s3 + $0x8] sm:$0xff]
  %v116 = vld [vmem:[%s3 + $0x10] sm:$0xff]
  %v117 = vld [vmem:[%s3 + $0x18] sm:$0xff]
  %v118 = vld [vmem:[%s3 + $0x20] sm:$0xff]
  %v119 = vld [vmem:[%s3 + $0x28] sm:$0xff]
  %v120 = vld [vmem:[%s3 + $0x30] sm:$0xff]
  %v121 = vld [vmem:[%s3 + $0x38] sm:$0xff]
  %v122 = vld [vmem:[%s3 + $0x40] sm:$0xff]
  %v123 = vld [vmem:[%s3 + $0x48] sm:$0xff]
  %v124 = vld [vmem:[%s3 + $0x50] sm:$0xff]
  %v125 = vld [vmem:[%s3 + $0x58] sm:$0xff]
  %v126 = vld [vmem:[%s3 + $0x60] sm:$0xff]
  %v127 = vld [vmem:[%s3 + $0x68] sm:$0xff]
  %v128 = vld [vmem:[%s3 + $0x70] sm:$0xff]
  %v129 = vld [vmem:[%s3 + $0x78] sm:$0xff]
  %130 = vmatprep.subr.mxu0 0.0
  %131 = vmatpush1.msra.mxu0 %v114
  %132 = vmatprep.subr.mxu0 0.0
  %133 = vmatpush1.msra.mxu0 %v115
  %134 = vmatprep.subr.mxu0 0.0
  %135 = vmatpush1.msra.mxu0 %v116
  %136 = vmatprep.subr.mxu0 0.0
  %137 = vmatpush1.msra.mxu0 %v117
  %138 = vmatprep.subr.mxu0 0.0
  %139 = vmatpush1.msra.mxu0 %v118
  %140 = vmatprep.subr.mxu0 0.0
  %141 = vmatpush1.msra.mxu0 %v119
  %142 = vmatprep.subr.mxu0 0.0
  %143 = vmatpush1.msra.mxu0 %v120
  %144 = vmatprep.subr.mxu0 0.0
  %145 = vmatpush1.msra.mxu0 %v121
  %146 = vmatprep.subr.mxu0 0.0
  %147 = vmatpush1.msra.mxu0 %v122
  %148 = vmatprep.subr.mxu0 0.0
  %149 = vmatpush1.msra.mxu0 %v123
  %150 = vmatprep.subr.mxu0 0.0
  %151 = vmatpush1.msra.mxu0 %v124
  %152 = vmatprep.subr.mxu0 0.0
  %153 = vmatpush1.msra.mxu0 %v125
  %154 = vmatprep.subr.mxu0 0.0
  %155 = vmatpush1.msra.mxu0 %v126
  %156 = vmatprep.subr.mxu0 0.0
  %157 = vmatpush1.msra.mxu0 %v127
  %158 = vmatprep.subr.mxu0 0.0
  %159 = vmatpush1.msra.mxu0 %v128
  %160 = vmatprep.subr.mxu0 0.0
  %161 = vmatpush1.msra.mxu0 %v129
  %162 = vmatprep.subr.mxu0 0.0
  %163 = vmatpush1.msra.mxu0 0.0
  %164 = vmatprep.subr.mxu0 0.0
  %165 = vmatpush1.msra.mxu0 0.0
  %166 = vmatprep.subr.mxu0 0.0
  %167 = vmatpush1.msra.mxu0 0.0
  %168 = vmatprep.subr.mxu0 0.0
  %169 = vmatpush1.msra.mxu0 0.0
  %170 = vmatprep.subr.mxu0 0.0
  %171 = vmatpush1.msra.mxu0 0.0
  %172 = vmatprep.subr.mxu0 0.0
  %173 = vmatpush1.msra.mxu0 0.0
  %174 = vmatprep.subr.mxu0 0.0
  %175 = vmatpush1.msra.mxu0 0.0
  %176 = vmatprep.subr.mxu0 0.0
  %177 = vmatpush1.msra.mxu0 0.0
  %178 = vmatprep.subr.mxu0 0.0
  %179 = vmatpush1.msra.mxu0 0.0
  %180 = vmatprep.subr.mxu0 0.0
  %181 = vmatpush1.msra.mxu0 0.0
  %182 = vmatprep.subr.mxu0 0.0
  %183 = vmatpush1.msra.mxu0 0.0
  %184 = vmatprep.subr.mxu0 0.0
  %185 = vmatpush1.msra.mxu0 0.0
  %186 = vmatprep.subr.mxu0 0.0
  %187 = vmatpush1.msra.mxu0 0.0
  %188 = vmatprep.subr.mxu0 0.0
  %189 = vmatpush1.msra.mxu0 0.0
  %190 = vmatprep.subr.mxu0 0.0
  %191 = vmatpush1.msra.mxu0 0.0
  %192 = vmatprep.subr.mxu0 0.0
  %193 = vmatpush1.msra.mxu0 0.0
  %194 = vmatprep.mubr.f32.mxu0 0.0
  %195 = vmatmul.mubr.f32.gmra.mrb[0].mxu0 %v98
  %v196 = vpop.f32.mrb[0].mxu0
  %v197 = vadd.f32 0.0, %v196
  %v198 = vpop.f32.mrb[0].mxu0
  %199 = vmatprep.mubr.f32.mxu0 0.0
  %200 = vmatmul.mubr.f32.gmra.mrb[0].mxu0 %v99
  %v201 = vpop.f32.mrb[0].mxu0
  %v202 = vadd.f32 0.0, %v201
  %v203 = vpop.f32.mrb[0].mxu0
  %204 = vmatprep.mubr.f32.mxu0 0.0
  %205 = vmatmul.mubr.f32.gmra.mrb[0].mxu0 %v100
  %v206 = vpop.f32.mrb[0].mxu0
  %v207 = vadd.f32 0.0, %v206
  %v208 = vpop.f32.mrb[0].mxu0
  %209 = vmatprep.mubr.f32.mxu0 0.0
  %210 = vmatmul.mubr.f32.gmra.mrb[0].mxu0 %v101
  %v211 = vpop.f32.mrb[0].mxu0
  %v212 = vadd.f32 0.0, %v211
  %v213 = vpop.f32.mrb[0].mxu0
  %214 = vmatprep.mubr.f32.mxu0 0.0
  %215 = vmatmul.mubr.f32.gmra.mrb[0].mxu0 %v102
  %v216 = vpop.f32.mrb[0].mxu0
  %v217 = vadd.f32 0.0, %v216
  %v218 = vpop.f32.mrb[0].mxu0
  %219 = vmatprep.mubr.f32.mxu0 0.0
  %220 = vmatmul.mubr.f32.gmra.mrb[0].mxu0 %v103
  %v221 = vpop.f32.mrb[0].mxu0
  %v222 = vadd.f32 0.0, %v221
  %v223 = vpop.f32.mrb[0].mxu0
  %224 = vmatprep.mubr.f32.mxu0 0.0
  %225 = vmatmul.mubr.f32.gmra.mrb[0].mxu0 %v104
  %v226 = vpop.f32.mrb[0].mxu0
  %v227 = vadd.f32 0.0, %v226
  %v228 = vpop.f32.mrb[0].mxu0
  %229 = vmatprep.mubr.f32.mxu0 0.0
  %230 = vmatmul.mubr.f32.gmra.mrb[0].mxu0 %v105
  %v231 = vpop.f32.mrb[0].mxu0
  %v232 = vadd.f32 0.0, %v231
  %v233 = vpop.f32.mrb[0].mxu0
  %234 = vmatprep.mubr.f32.mxu0 0.0
  %235 = vmatmul.mubr.f32.gmra.mrb[0].mxu0 %v106
  %v236 = vpop.f32.mrb[0].mxu0
  %v237 = vadd.f32 0.0, %v236
  %v238 = vpop.f32.mrb[0].mxu0
  %239 = vmatprep.mubr.f32.mxu0 0.0
  %240 = vmatmul.mubr.f32.gmra.mrb[0].mxu0 %v107
  %v241 = vpop.f32.mrb[0].mxu0
  %v242 = vadd.f32 0.0, %v241
  %v243 = vpop.f32.mrb[0].mxu0
  %244 = vmatprep.mubr.f32.mxu0 0.0
  %245 = vmatmul.mubr.f32.gmra.mrb[0].mxu0 %v108
  %v246 = vpop.f32.mrb[0].mxu0
  %v247 = vadd.f32 0.0, %v246
  %v248 = vpop.f32.mrb[0].mxu0
  %249 = vmatprep.mubr.f32.mxu0 0.0
  %250 = vmatmul.mubr.f32.gmra.mrb[0].mxu0 %v109
  %v251 = vpop.f32.mrb[0].mxu0
  %v252 = vadd.f32 0.0, %v251
  %v253 = vpop.f32.mrb[0].mxu0
  %254 = vmatprep.mubr.f32.mxu0 0.0
  %255 = vmatmul.mubr.f32.gmra.mrb[0].mxu0 %v110
  %v256 = vpop.f32.mrb[0].mxu0
  %v257 = vadd.f32 0.0, %v256
  %v258 = vpop.f32.mrb[0].mxu0
  %259 = vmatprep.mubr.f32.mxu0 0.0
  %260 = vmatmul.mubr.f32.gmra.mrb[0].mxu0 %v111
  %v261 = vpop.f32.mrb[0].mxu0
  %v262 = vadd.f32 0.0, %v261
  %v263 = vpop.f32.mrb[0].mxu0
  %264 = vmatprep.mubr.f32.mxu0 0.0
  %265 = vmatmul.mubr.f32.gmra.mrb[0].mxu0 %v112
  %v266 = vpop.f32.mrb[0].mxu0
  %v267 = vadd.f32 0.0, %v266
  %v268 = vpop.f32.mrb[0].mxu0
  %269 = vmatprep.mubr.f32.mxu0 0.0
  %270 = vmatmul.mubr.f32.gmra.mrb[0].mxu0 %v113
  %v271 = vpop.f32.mrb[0].mxu0
  %v272 = vadd.f32 0.0, %v271
  %v273 = vpop.f32.mrb[0].mxu0
  %274 = vdwg.mxu0
  %275 = vst [vmem:[%s4] sm:$0xff] %v197
  %276 = vst [vmem:[%s4 + $0x8] sm:$0xff] %v202
  %277 = vst [vmem:[%s4 + $0x10] sm:$0xff] %v207
  %278 = vst [vmem:[%s4 + $0x18] sm:$0xff] %v212
  %279 = vst [vmem:[%s4 + $0x20] sm:$0xff] %v217
  %280 = vst [vmem:[%s4 + $0x28] sm:$0xff] %v222
  %281 = vst [vmem:[%s4 + $0x30] sm:$0xff] %v227
  %282 = vst [vmem:[%s4 + $0x38] sm:$0xff] %v232
  %283 = vst [vmem:[%s4 + $0x40] sm:$0xff] %v237
  %284 = vst [vmem:[%s4 + $0x48] sm:$0xff] %v242
  %285 = vst [vmem:[%s4 + $0x50] sm:$0xff] %v247
  %286 = vst [vmem:[%s4 + $0x58] sm:$0xff] %v252
  %287 = vst [vmem:[%s4 + $0x60] sm:$0xff] %v257
  %288 = vst [vmem:[%s4 + $0x68] sm:$0xff] %v262
  %289 = vst [vmem:[%s4 + $0x70] sm:$0xff] %v267
  %290 = vst [vmem:[%s4 + $0x78] sm:$0xff] %v272
  %v291 = vadd.f32 %v197, %v202
  %v292 = vadd.f32 %v291, %v207
  %v293 = vadd.f32 %v292, %v212
  %v294 = vadd.f32 %v293, %v217
  %v295 = vadd.f32 %v294, %v222
  %v296 = vadd.f32 %v295, %v227
  %v297 = vadd.f32 %v296, %v232
  %v298 = vadd.f32 %v297, %v237
  %v299 = vadd.f32 %v298, %v242
  %v300 = vadd.f32 %v299, %v247
  %v301 = vadd.f32 %v300, %v252
  %v302 = vadd.f32 %v301, %v257
  %v303 = vadd.f32 %v302, %v262
  %v304 = vadd.f32 %v303, %v267
  %v305 = vadd.f32 %v304, %v272
  %v306 = vrot.slane %v305, 4
  %v307 = vadd.f32 %v305, %v306
  %v308 = vrot.slane %v307, 2
  %v309 = vadd.f32 %v307, %v308
  %v310 = vrot.slane %v309, 1
  %v311 = vadd.f32 %v309, %v310
  %312 = vst [vmem:[%s5] sm:$0xff] %v311
  %v313 = vmul.f32 %v197, %v197
  %v314 = vmul.f32 %v202, %v202
  %v315 = vmul.f32 %v207, %v207
  %v316 = vmul.f32 %v212, %v212
  %v317 = vmul.f32 %v217, %v217
  %v318 = vmul.f32 %v222, %v222
  %v319 = vmul.f32 %v227, %v227
  %v320 = vmul.f32 %v232, %v232
  %v321 = vmul.f32 %v237, %v237
  %v322 = vmul.f32 %v242, %v242
  %v323 = vmul.f32 %v247, %v247
  %v324 = vmul.f32 %v252, %v252
  %v325 = vmul.f32 %v257, %v257
  %v326 = vmul.f32 %v262, %v262
  %v327 = vmul.f32 %v267, %v267
  %v328 = vmul.f32 %v272, %v272
  %v329 = vadd.f32 %v313, %v314
  %v330 = vadd.f32 %v329, %v315
  %v331 = vadd.f32 %v330, %v316
  %v332 = vadd.f32 %v331, %v317
  %v333 = vadd.f32 %v332, %v318
  %v334 = vadd.f32 %v333, %v319
  %v335 = vadd.f32 %v334, %v320
  %v336 = vadd.f32 %v335, %v321
  %v337 = vadd.f32 %v336, %v322
  %v338 = vadd.f32 %v337, %v323
  %v339 = vadd.f32 %v338, %v324
  %v340 = vadd.f32 %v339, %v325
  %v341 = vadd.f32 %v340, %v326
  %v342 = vadd.f32 %v341, %v327
  %v343 = vadd.f32 %v342, %v328
  %v344 = vrot.slane %v343, 4
  %v345 = vadd.f32 %v343, %v344
  %v346 = vrot.slane %v345, 2
  %v347 = vadd.f32 %v345, %v346
  %v348 = vrot.slane %v347, 1
  %v349 = vadd.f32 %v347, %v348
  %350 = vst [vmem:[%s6] sm:$0xff] %v349
  // Predicated region
  $region18: #{model_forward.4} parent=0 // pred_check
    _
  $region19: #{model_forward.4} parent=0 // pred_check_branch
    %352 = sbr.rel (0) target = $region21
  $region20: #{model_forward.4} parent=0 // pred_region
    _
  $region21: #{model_forward.4} parent=0 // pred_fallthru
    _
  // Predicated region
  $region22: #{model_forward.4} parent=0 // pred_check
    _
  $region23: #{model_forward.4} parent=0 // pred_check_branch
    %354 = sbr.rel (0) target = $region25
  $region24: #{model_forward.4} parent=0 // pred_region
    _
  $region25: #{model_forward.4} parent=0 // pred_fallthru
    _
  // Predicated region
  $region26: #{model_forward.4} parent=0 // pred_check
    _
  $region27: #{model_forward.4} parent=0 // pred_check_branch
    %356 = sbr.rel (0) target = $region29
  $region28: #{model_forward.4} parent=0 // pred_region
    _
  $region29: #{model_forward.4} parent=0 // pred_fallthru
    _
  // Predicated region
  $region30: #{model_forward.4} parent=0 // pred_check
    _
  $region31: #{model_forward.4} parent=0 // pred_check_branch
    %358 = sbr.rel (0) target = $region33
  $region32: #{model_forward.4} parent=0 // pred_region
    _
  $region33: #{model_forward.4} parent=0 // pred_fallthru
    _
  // Predicated region
  $region34: #{model_forward.4} parent=0 // pred_check
    _
  $region35: #{model_forward.4} parent=0 // pred_check_branch
    %360 = sbr.rel (0) target = $region37
  $region36: #{model_forward.4} parent=0 // pred_region
    _
  $region37: #{model_forward.4} parent=0 // pred_fallthru
    _
  // Predicated region
  $region38: #{model_forward.4} parent=0 // pred_check
    _
  $region39: #{model_forward.4} parent=0 // pred_check_branch
    %362 = sbr.rel (0) target = $region41
  $region40: #{model_forward.4} parent=0 // pred_region
    _
  $region41: #{model_forward.4} parent=0 // pred_fallthru
    _

// kernel: model_forward.3
$region0: #{model_forward.3}
  #allocation0 [shape = 'u32[]', space=smem, size = 0x4, offset = 0x4, fixed_abs, tag = 'smem constant byte address 0x4 - core index']
  #allocation1 [shape = 'u32[144,128]{1,0:T(1,128)}', space=vmem, size = 0x12000, scoped, tag = 'internal scratch']
  %s0 = inlined_call_operand.vmem [shape: f32[2,9,9,128], index: 0, kind: input, shape index: {}]
  %s1 = inlined_call_operand.vmem [shape: f32[2,9,8,128], index: 1, kind: input, shape index: {}]
  %s2 = inlined_call_operand.vmem [shape: f32[2,8,9,128], index: 2, kind: input, shape index: {}]
  %s3 = inlined_call_operand.vmem [shape: f32[2,8,8,128], index: 3, kind: input, shape index: {}]
  %s4 = inlined_call_operand.vmem [shape: f32[3,3,128], index: 4, kind: input, shape index: {}]
  %s5 = inlined_call_operand.vmem [shape: f32[2,8,8,128], index: 5, kind: output, shape index: {0}]
  %s6 = inlined_call_operand.vmem [shape: f32[16,128], index: 6, kind: output, shape index: {1}]
  %s7 = inlined_call_operand.vmem [shape: f32[16,128], index: 7, kind: output, shape index: {2}]
  %8 = xla_tuple %s5, %s6, %s7
  %s9 = sld [smem:[#allocation0]]
  $region69: #{model_forward.3} parent=0
    _
  %s11 = ssub.s32 1, %s9
  %s12 = scalar_select 0, %s11, %s9
  loop: start=0, step=1, limit=4
  $region2: #{model_forward.3} parent=0 // loop_pre_header
    _
  $region3: #{model_forward.3} parent=0 // loop_header
    %s14 = sphi 0, %s18
    %p15 = scmp.ge.s32.totalorder %s14, 4
    %s24 = sphi 0, %s26
    %s27 = sphi 0, %s24
    %s28 = sphi 0, %s27
    %s44 = sphi 0, %s28
    %s50 = sphi 0, %s52
    %s53 = sphi 0, %s50
    %s54 = sphi 0, %s53
    %s70 = sphi 0, %s54
    %s76 = sphi 0, %s78
    %s79 = sphi 0, %s76
    %s80 = sphi 0, %s79
    %s96 = sphi 0, %s80
    %s102 = sphi 0, %s104
    %s105 = sphi 0, %s102
    %s106 = sphi 0, %s105
    %s122 = sphi 0, %s106
    %s126 = sphi 0, %s126
    %s128 = sphi 0, %s126
    %s129 = sphi 0, %s128
    %s143 = sphi 0, %s129
    %s149 = sphi 0, %s151
    %s152 = sphi 0, %s149
    %s153 = sphi 0, %s152
    %s169 = sphi 0, %s153
    %s175 = sphi 0, %s177
    %s178 = sphi 0, %s175
    %s179 = sphi 0, %s178
    %s195 = sphi 0, %s179
    %s201 = sphi 0, %s203
    %s204 = sphi 0, %s201
    %s205 = sphi 0, %s204
    %s221 = sphi 0, %s205
  $region4: #{model_forward.3} parent=0 // loop_header_branch
    %17 = sbr.rel (%p15) target = $region8
  $region5: #{model_forward.3} parent=0 // loop_body
    %s19 = ssub.s32 %s14, 1
    %s20 = ssub.s32 %s14, 2
    %s21 = sadd.s32 %s14, 1
    %s22 = ssub.s32 %s14, %s21
    %p23 = scmp.eq.s32.totalorder %s22, 0
    %s25 = sadd.s32 %s24, 1
    %s26 = scalar_select %p23, %s24, %s25
    %p29 = pneg %p23
    %p30 = scmp.eq.s32.totalorder %s14, 1
    %p31 = por %p29, %p30
    %p32 = scmp.ne.s32.totalorder %s24, %s27
    %p33 = scmp.eq.s32.totalorder %s14, 0
    %p34 = por %p32, %p33
    %p35 = scmp.ne.s32.totalorder %s24, %s27
    %p36 = scmp.eq.s32.totalorder %s19, 1
    %p37 = por %p35, %p36
    %p38 = scmp.ne.s32.totalorder %s27, %s28
    %p39 = scmp.eq.s32.totalorder %s19, 0
    %p40 = por %p38, %p39
    %p41 = scmp.ne.s32.totalorder %s27, %s28
    %p42 = scmp.eq.s32.totalorder %s20, 1
    %p43 = por %p41, %p42
    %p45 = scmp.ne.s32.totalorder %s28, %s44
    %p46 = scmp.eq.s32.totalorder %s20, 0
    %p47 = por %p45, %p46
    %s48 = ssub.s32 %s14, %s21
    %p49 = scmp.eq.s32.totalorder %s48, 0
    %s51 = sadd.s32 %s50, 1
    %s52 = scalar_select %p49, %s50, %s51
    %p55 = pneg %p49
    %p56 = scmp.eq.s32.totalorder %s14, 1
    %p57 = por %p55, %p56
    %p58 = scmp.ne.s32.totalorder %s50, %s53
    %p59 = scmp.eq.s32.totalorder %s14, 0
    %p60 = por %p58, %p59
    %p61 = scmp.ne.s32.totalorder %s50, %s53
    %p62 = scmp.eq.s32.totalorder %s19, 1
    %p63 = por %p61, %p62
    %p64 = scmp.ne.s32.totalorder %s53, %s54
    %p65 = scmp.eq.s32.totalorder %s19, 0
    %p66 = por %p64, %p65
    %p67 = scmp.ne.s32.totalorder %s53, %s54
    %p68 = scmp.eq.s32.totalorder %s20, 1
    %p69 = por %p67, %p68
    %p71 = scmp.ne.s32.totalorder %s54, %s70
    %p72 = scmp.eq.s32.totalorder %s20, 0
    %p73 = por %p71, %p72
    %s74 = ssub.s32 %s14, %s21
    %p75 = scmp.eq.s32.totalorder %s74, 0
    %s77 = sadd.s32 %s76, 1
    %s78 = scalar_select %p75, %s76, %s77
    %p81 = pneg %p75
    %p82 = scmp.eq.s32.totalorder %s14, 1
    %p83 = por %p81, %p82
    %p84 = scmp.ne.s32.totalorder %s76, %s79
    %p85 = scmp.eq.s32.totalorder %s14, 0
    %p86 = por %p84, %p85
    %p87 = scmp.ne.s32.totalorder %s76, %s79
    %p88 = scmp.eq.s32.totalorder %s19, 1
    %p89 = por %p87, %p88
    %p90 = scmp.ne.s32.totalorder %s79, %s80
    %p91 = scmp.eq.s32.totalorder %s19, 0
    %p92 = por %p90, %p91
    %p93 = scmp.ne.s32.totalorder %s79, %s80
    %p94 = scmp.eq.s32.totalorder %s20, 1
    %p95 = por %p93, %p94
    %p97 = scmp.ne.s32.totalorder %s80, %s96
    %p98 = scmp.eq.s32.totalorder %s20, 0
    %p99 = por %p97, %p98
    %s100 = ssub.s32 %s14, %s21
    %p101 = scmp.eq.s32.totalorder %s100, 0
    %s103 = sadd.s32 %s102, 1
    %s104 = scalar_select %p101, %s102, %s103
    %p107 = pneg %p101
    %p108 = scmp.eq.s32.totalorder %s14, 1
    %p109 = por %p107, %p108
    %p110 = scmp.ne.s32.totalorder %s102, %s105
    %p111 = scmp.eq.s32.totalorder %s14, 0
    %p112 = por %p110, %p111
    %p113 = scmp.ne.s32.totalorder %s102, %s105
    %p114 = scmp.eq.s32.totalorder %s19, 1
    %p115 = por %p113, %p114
    %p116 = scmp.ne.s32.totalorder %s105, %s106
    %p117 = scmp.eq.s32.totalorder %s19, 0
    %p118 = por %p116, %p117
    %p119 = scmp.ne.s32.totalorder %s105, %s106
    %p120 = scmp.eq.s32.totalorder %s20, 1
    %p121 = por %p119, %p120
    %p123 = scmp.ne.s32.totalorder %s106, %s122
    %p124 = scmp.eq.s32.totalorder %s20, 0
    %p125 = por %p123, %p124
    %s127 = sadd.s32 %s126, 1
    %p130 = scmp.eq.s32.totalorder %s14, 1
    %p131 = scmp.ne.s32.totalorder %s126, %s128
    %p132 = scmp.eq.s32.totalorder %s14, 0
    %p133 = por %p131, %p132
    %p134 = scmp.ne.s32.totalorder %s126, %s128
    %p135 = scmp.eq.s32.totalorder %s19, 1
    %p136 = por %p134, %p135
    %p137 = scmp.ne.s32.totalorder %s128, %s129
    %p138 = scmp.eq.s32.totalorder %s19, 0
    %p139 = por %p137, %p138
    %p140 = scmp.ne.s32.totalorder %s128, %s129
    %p141 = scmp.eq.s32.totalorder %s20, 1
    %p142 = por %p140, %p141
    %p144 = scmp.ne.s32.totalorder %s129, %s143
    %p145 = scmp.eq.s32.totalorder %s20, 0
    %p146 = por %p144, %p145
    %s147 = ssub.s32 %s14, %s21
    %p148 = scmp.eq.s32.totalorder %s147, 0
    %s150 = sadd.s32 %s149, 1
    %s151 = scalar_select %p148, %s149, %s150
    %p154 = pneg %p148
    %p155 = scmp.eq.s32.totalorder %s14, 1
    %p156 = por %p154, %p155
    %p157 = scmp.ne.s32.totalorder %s149, %s152
    %p158 = scmp.eq.s32.totalorder %s14, 0
    %p159 = por %p157, %p158
    %p160 = scmp.ne.s32.totalorder %s149, %s152
    %p161 = scmp.eq.s32.totalorder %s19, 1
    %p162 = por %p160, %p161
    %p163 = scmp.ne.s32.totalorder %s152, %s153
    %p164 = scmp.eq.s32.totalorder %s19, 0
    %p165 = por %p163, %p164
    %p166 = scmp.ne.s32.totalorder %s152, %s153
    %p167 = scmp.eq.s32.totalorder %s20, 1
    %p168 = por %p166, %p167
    %p170 = scmp.ne.s32.totalorder %s153, %s169
    %p171 = scmp.eq.s32.totalorder %s20, 0
    %p172 = por %p170, %p171
    %s173 = ssub.s32 %s14, %s21
    %p174 = scmp.eq.s32.totalorder %s173, 0
    %s176 = sadd.s32 %s175, 1
    %s177 = scalar_select %p174, %s175, %s176
    %p180 = pneg %p174
    %p181 = scmp.eq.s32.totalorder %s14, 1
    %p182 = por %p180, %p181
    %p183 = scmp.ne.s32.totalorder %s175, %s178
    %p184 = scmp.eq.s32.totalorder %s14, 0
    %p185 = por %p183, %p184
    %p186 = scmp.ne.s32.totalorder %s175, %s178
    %p187 = scmp.eq.s32.totalorder %s19, 1
    %p188 = por %p186, %p187
    %p189 = scmp.ne.s32.totalorder %s178, %s179
    %p190 = scmp.eq.s32.totalorder %s19, 0
    %p191 = por %p189, %p190
    %p192 = scmp.ne.s32.totalorder %s178, %s179
    %p193 = scmp.eq.s32.totalorder %s20, 1
    %p194 = por %p192, %p193
    %p196 = scmp.ne.s32.totalorder %s179, %s195
    %p197 = scmp.eq.s32.totalorder %s20, 0
    %p198 = por %p196, %p197
    %s199 = ssub.s32 %s14, %s21
    %p200 = scmp.eq.s32.totalorder %s199, 0
    %s202 = sadd.s32 %s201, 1
    %s203 = scalar_select %p200, %s201, %s202
    %p206 = pneg %p200
    %p207 = scmp.eq.s32.totalorder %s14, 1
    %p208 = por %p206, %p207
    %p209 = scmp.ne.s32.totalorder %s201, %s204
    %p210 = scmp.eq.s32.totalorder %s14, 0
    %p211 = por %p209, %p210
    %p212 = scmp.ne.s32.totalorder %s201, %s204
    %p213 = scmp.eq.s32.totalorder %s19, 1
    %p214 = por %p212, %p213
    %p215 = scmp.ne.s32.totalorder %s204, %s205
    %p216 = scmp.eq.s32.totalorder %s19, 0
    %p217 = por %p215, %p216
    %p218 = scmp.ne.s32.totalorder %s204, %s205
    %p219 = scmp.eq.s32.totalorder %s20, 1
    %p220 = por %p218, %p219
    %p222 = scmp.ne.s32.totalorder %s205, %s221
    %p223 = scmp.eq.s32.totalorder %s20, 0
    %p224 = por %p222, %p223
    %p225 = scmp.le.s32.totalorder 1, %s14
    %p226 = scmp.lt.s32.totalorder %s14, 3
    %p227 = pnand %p225, %p226
    %p228 = pneg %p227
    // Predicated region
    $region9: #{model_forward.3} parent=5 // pred_check
      _
    $region10: #{model_forward.3} parent=5 // pred_check_branch
      %230 = sbr.rel (%p227) target = $region12
    $region11: #{model_forward.3} parent=5 // pred_region
      %s231 = ssub.s32 %s14, 1
      // Predicated region
      $region13: #{model_forward.3} parent=11 // pred_check
        %p232 = pneg %p139
      $region14: #{model_forward.3} parent=11 // pred_check_branch
        %234 = sbr.rel (%p232) target = $region16
      $region15: #{model_forward.3} parent=11 // pred_region
        _
      $region16: #{model_forward.3} parent=11 // pred_fallthru
        _
    $region12: #{model_forward.3} parent=5 // pred_fallthru
      _
    %p235 = scmp.lt.s32.totalorder %s14, 2
    // Predicated region
    $region17: #{model_forward.3} parent=5 // pred_check
      %p236 = pneg %p235
    $region18: #{model_forward.3} parent=5 // pred_check_branch
      %238 = sbr.rel (%p236) target = $region20
    $region19: #{model_forward.3} parent=5 // pred_region
      // Predicated region
      $region21: #{model_forward.3} parent=19 // pred_check
        %p239 = pneg %p34
      $region22: #{model_forward.3} parent=19 // pred_check_branch
        %241 = sbr.rel (%p239) target = $region24
      $region23: #{model_forward.3} parent=19 // pred_region
        %p242 = scmp.lt.s32.totalorder %s14, 1
        %s243 = scalar_select %p242, %s14, 1
        %s244 = smul.addr %s243, 18
        %s245 = smul.addr %s244, 8
        %s246 = scalar_lea.vmem %s0, %s245
      $region24: #{model_forward.3} parent=19 // pred_fallthru
        _
      // Predicated region
      $region25: #{model_forward.3} parent=19 // pred_check
        %p247 = pneg %p60
      $region26: #{model_forward.3} parent=19 // pred_check_branch
        %249 = sbr.rel (%p247) target = $region28
      $region27: #{model_forward.3} parent=19 // pred_region
        %p250 = scmp.lt.s32.totalorder %s14, 1
        %s251 = scalar_select %p250, %s14, 1
        %s252 = smul.addr %s251, 9
        %s253 = smul.addr %s252, 8
        %s254 = scalar_lea.vmem %s1, %s253
      $region28: #{model_forward.3} parent=19 // pred_fallthru
        _
      // Predicated region
      $region29: #{model_forward.3} parent=19 // pred_check
        %p255 = pneg %p86
      $region30: #{model_forward.3} parent=19 // pred_check_branch
        %257 = sbr.rel (%p255) target = $region32
      $region31: #{model_forward.3} parent=19 // pred_region
        %p258 = scmp.lt.s32.totalorder %s14, 1
        %s259 = scalar_select %p258, %s14, 1
        %s260 = smul.addr %s259, 16
        %s261 = smul.addr %s260, 8
        %s262 = scalar_lea.vmem %s2, %s261
      $region32: #{model_forward.3} parent=19 // pred_fallthru
        _
      // Predicated region
      $region33: #{model_forward.3} parent=19 // pred_check
        %p263 = pneg %p112
      $region34: #{model_forward.3} parent=19 // pred_check_branch
        %265 = sbr.rel (%p263) target = $region36
      $region35: #{model_forward.3} parent=19 // pred_region
        %p266 = scmp.lt.s32.totalorder %s14, 1
        %s267 = scalar_select %p266, %s14, 1
        %s268 = smul.addr %s267, 8
        %s269 = smul.addr %s268, 8
        %s270 = scalar_lea.vmem %s3, %s269
      $region36: #{model_forward.3} parent=19 // pred_fallthru
        _
    $region20: #{model_forward.3} parent=5 // pred_fallthru
      _
    %p271 = scmp.le.s32.totalorder 1, %s14
    %p272 = scmp.lt.s32.totalorder %s14, 3
    %p273 = pnand %p271, %p272
    %p274 = pneg %p273
    // Predicated region
    $region37: #{model_forward.3} parent=5 // pred_check
      _
    $region38: #{model_forward.3} parent=5 // pred_check_branch
      %276 = sbr.rel (%p273) target = $region40
    $region39: #{model_forward.3} parent=5 // pred_region
      %s277 = ssub.s32 %s14, 1
      %p278 = scmp.lt.s32.totalorder %s19, 1
      %s279 = scalar_select %p278, %s19, 1
      %s280 = smul.addr %s279, 18
      %s281 = smul.addr %s280, 8
      %s282 = scalar_lea.vmem %s0, %s281
      %p283 = pneg %p40
      %p284 = pneg %p37
      %p285 = scmp.lt.s32.totalorder %s19, 1
      %s286 = scalar_select %p285, %s19, 1
      %s287 = smul.addr %s286, 9
      %s288 = smul.addr %s287, 8
      %s289 = scalar_lea.vmem %s1, %s288
      %p290 = pneg %p66
      %p291 = pneg %p63
      %p292 = scmp.lt.s32.totalorder %s19, 1
      %s293 = scalar_select %p292, %s19, 1
      %s294 = smul.addr %s293, 16
      %s295 = smul.addr %s294, 8
      %s296 = scalar_lea.vmem %s2, %s295
      %p297 = pneg %p92
      %p298 = pneg %p89
      %p299 = scmp.lt.s32.totalorder %s19, 1
      %s300 = scalar_select %p299, %s19, 1
      %s301 = smul.addr %s300, 8
      %s302 = smul.addr %s301, 8
      %s303 = scalar_lea.vmem %s3, %s302
      %p304 = pneg %p118
      %p305 = pneg %p115
      %p306 = pneg %p139
      %p307 = pneg %p136
      %p308 = pneg %p165
      %p309 = pneg %p162
      %p310 = scmp.lt.s32.totalorder %s19, 1
      %s311 = scalar_select %p310, %s19, 1
      %s312 = smul.addr %s311, 8
      %s313 = smul.addr %s312, 8
      %s314 = scalar_lea.vmem %s5, %s313
      %p315 = pneg %p191
      %p316 = pneg %p188
      %p317 = scmp.lt.s32.totalorder %s19, 1
      %s318 = scalar_select %p317, %s19, 1
      %s319 = smul.addr %s318, 8
      %s320 = scalar_lea.vmem %s6, %s319
      %p321 = pneg %p217
      %p322 = pneg %p214
      %p323 = scmp.lt.s32.totalorder %s19, 1
      %s324 = scalar_select %p323, %s19, 1
      %s325 = smul.addr %s324, 8
      %s326 = scalar_lea.vmem %s7, %s325
      %p327 = scmp.lt.s32.totalorder %s19, 1
      %s328 = scalar_select %p327, %s19, 1
      %s329 = smul.addr %s328, 18
      %s330 = smul.addr %s329, 8
      %s331 = scalar_lea.vmem %s0, %s330
      %p332 = scmp.lt.s32.totalorder %s19, 1
      %s333 = scalar_select %p332, %s19, 1
      %s334 = smul.addr %s333, 9
      %s335 = smul.addr %s334, 8
      %s336 = scalar_lea.vmem %s1, %s335
      %p337 = scmp.lt.s32.totalorder %s19, 1
      %s338 = scalar_select %p337, %s19, 1
      %s339 = smul.addr %s338, 16
      %s340 = smul.addr %s339, 8
      %s341 = scalar_lea.vmem %s2, %s340
      %p342 = scmp.lt.s32.totalorder %s19, 1
      %s343 = scalar_select %p342, %s19, 1
      %s344 = smul.addr %s343, 8
      %s345 = smul.addr %s344, 8
      %s346 = scalar_lea.vmem %s3, %s345
      %p347 = scmp.lt.s32.totalorder %s19, 1
      %s348 = scalar_select %p347, %s19, 1
      %s349 = smul.addr %s348, 8
      %s350 = smul.addr %s349, 8
      %s351 = scalar_lea.vmem %s5, %s350
      %p352 = scmp.lt.s32.totalorder %s19, 1
      %s353 = scalar_select %p352, %s19, 1
      %s354 = smul.addr %s353, 8
      %s355 = scalar_lea.vmem %s6, %s354
      %p356 = scmp.lt.s32.totalorder %s19, 1
      %s357 = scalar_select %p356, %s19, 1
      %s358 = smul.addr %s357, 8
      %s359 = scalar_lea.vmem %s7, %s358
      %v360 = vld [vmem:[%s331] sm:$0xff]
      %v361 = vld [vmem:[%s331 + $0x8] sm:$0x1]
      %v362 = vld [vmem:[%s331 + $0x10] sm:$0xff]
      %v363 = vld [vmem:[%s331 + $0x18] sm:$0x1]
      %v364 = vld [vmem:[%s331 + $0x20] sm:$0xff]
      %v365 = vld [vmem:[%s331 + $0x28] sm:$0x1]
      %v366 = vld [vmem:[%s331 + $0x30] sm:$0xff]
      %v367 = vld [vmem:[%s331 + $0x38] sm:$0x1]
      %v368 = vld [vmem:[%s331 + $0x40] sm:$0xff]
      %v369 = vld [vmem:[%s331 + $0x48] sm:$0x1]
      %v370 = vld [vmem:[%s331 + $0x50] sm:$0xff]
      %v371 = vld [vmem:[%s331 + $0x58] sm:$0x1]
      %v372 = vld [vmem:[%s331 + $0x60] sm:$0xff]
      %v373 = vld [vmem:[%s331 + $0x68] sm:$0x1]
      %v374 = vld [vmem:[%s331 + $0x70] sm:$0xff]
      %v375 = vld [vmem:[%s331 + $0x78] sm:$0x1]
      %v376 = vld [vmem:[%s331 + $0x80] sm:$0xff]
      %v377 = vld [vmem:[%s331 + $0x88] sm:$0x1]
      %v378 = vmax.f32 %v360, 0.0
      %v379 = vmax.f32 %v361, 0.0
      %v380 = vmax.f32 %v362, 0.0
      %v381 = vmax.f32 %v363, 0.0
      %v382 = vmax.f32 %v364, 0.0
      %v383 = vmax.f32 %v365, 0.0
      %v384 = vmax.f32 %v366, 0.0
      %v385 = vmax.f32 %v367, 0.0
      %v386 = vmax.f32 %v368, 0.0
      %v387 = vmax.f32 %v369, 0.0
      %v388 = vmax.f32 %v370, 0.0
      %v389 = vmax.f32 %v371, 0.0
      %v390 = vmax.f32 %v372, 0.0
      %v391 = vmax.f32 %v373, 0.0
      %v392 = vmax.f32 %v374, 0.0
      %v393 = vmax.f32 %v375, 0.0
      %v394 = vmax.f32 %v376, 0.0
      %v395 = vmax.f32 %v377, 0.0
      %v396 = vmin.f32 %v378, 6.0
      %v397 = vmin.f32 %v379, 6.0
      %v398 = vmin.f32 %v380, 6.0
      %v399 = vmin.f32 %v381, 6.0
      %v400 = vmin.f32 %v382, 6.0
      %v401 = vmin.f32 %v383, 6.0
      %v402 = vmin.f32 %v384, 6.0
      %v403 = vmin.f32 %v385, 6.0
      %v404 = vmin.f32 %v386, 6.0
      %v405 = vmin.f32 %v387, 6.0
      %v406 = vmin.f32 %v388, 6.0
      %v407 = vmin.f32 %v389, 6.0
      %v408 = vmin.f32 %v390, 6.0
      %v409 = vmin.f32 %v391, 6.0
      %v410 = vmin.f32 %v392, 6.0
      %v411 = vmin.f32 %v393, 6.0
      %v412 = vmin.f32 %v394, 6.0
      %v413 = vmin.f32 %v395, 6.0
      %v414 = vld [vmem:[%s336] sm:$0xff]
      %v415 = vld [vmem:[%s336 + $0x8] sm:$0xff]
      %v416 = vld [vmem:[%s336 + $0x10] sm:$0xff]
      %v417 = vld [vmem:[%s336 + $0x18] sm:$0xff]
      %v418 = vld [vmem:[%s336 + $0x20] sm:$0xff]
      %v419 = vld [vmem:[%s336 + $0x28] sm:$0xff]
      %v420 = vld [vmem:[%s336 + $0x30] sm:$0xff]
      %v421 = vld [vmem:[%s336 + $0x38] sm:$0xff]
      %v422 = vld [vmem:[%s336 + $0x40] sm:$0xff]
      %v423 = vmax.f32 %v414, 0.0
      %v424 = vmax.f32 %v415, 0.0
      %v425 = vmax.f32 %v416, 0.0
      %v426 = vmax.f32 %v417, 0.0
      %v427 = vmax.f32 %v418, 0.0
      %v428 = vmax.f32 %v419, 0.0
      %v429 = vmax.f32 %v420, 0.0
      %v430 = vmax.f32 %v421, 0.0
      %v431 = vmax.f32 %v422, 0.0
      %v432 = vmin.f32 %v423, 6.0
      %v433 = vmin.f32 %v424, 6.0
      %v434 = vmin.f32 %v425, 6.0
      %v435 = vmin.f32 %v426, 6.0
      %v436 = vmin.f32 %v427, 6.0
      %v437 = vmin.f32 %v428, 6.0
      %v438 = vmin.f32 %v429, 6.0
      %v439 = vmin.f32 %v430, 6.0
      %v440 = vmin.f32 %v431, 6.0
      %v441 = vld [vmem:[%s341] sm:$0xff]
      %v442 = vld [vmem:[%s341 + $0x8] sm:$0x1]
      %v443 = vld [vmem:[%s341 + $0x10] sm:$0xff]
      %v444 = vld [vmem:[%s341 + $0x18] sm:$0x1]
      %v445 = vld [vmem:[%s341 + $0x20] sm:$0xff]
      %v446 = vld [vmem:[%s341 + $0x28] sm:$0x1]
      %v447 = vld [vmem:[%s341 + $0x30] sm:$0xff]
      %v448 = vld [vmem:[%s341 + $0x38] sm:$0x1]
      %v449 = vld [vmem:[%s341 + $0x40] sm:$0xff]
      %v450 = vld [vmem:[%s341 + $0x48] sm:$0x1]
      %v451 = vld [vmem:[%s341 + $0x50] sm:$0xff]
      %v452 = vld [vmem:[%s341 + $0x58] sm:$0x1]
      %v453 = vld [vmem:[%s341 + $0x60] sm:$0xff]
      %v454 = vld [vmem:[%s341 + $0x68] sm:$0x1]
      %v455 = vld [vmem:[%s341 + $0x70] sm:$0xff]
      %v456 = vld [vmem:[%s341 + $0x78] sm:$0x1]
      %v457 = vmax.f32 %v441, 0.0
      %v458 = vmax.f32 %v442, 0.0
      %v459 = vmax.f32 %v443, 0.0
      %v460 = vmax.f32 %v444, 0.0
      %v461 = vmax.f32 %v445, 0.0
      %v462 = vmax.f32 %v446, 0.0
      %v463 = vmax.f32 %v447, 0.0
      %v464 = vmax.f32 %v448, 0.0
      %v465 = vmax.f32 %v449, 0.0
      %v466 = vmax.f32 %v450, 0.0
      %v467 = vmax.f32 %v451, 0.0
      %v468 = vmax.f32 %v452, 0.0
      %v469 = vmax.f32 %v453, 0.0
      %v470 = vmax.f32 %v454, 0.0
      %v471 = vmax.f32 %v455, 0.0
      %v472 = vmax.f32 %v456, 0.0
      %v473 = vmin.f32 %v457, 6.0
      %v474 = vmin.f32 %v458, 6.0
      %v475 = vmin.f32 %v459, 6.0
      %v476 = vmin.f32 %v460, 6.0
      %v477 = vmin.f32 %v461, 6.0
      %v478 = vmin.f32 %v462, 6.0
      %v479 = vmin.f32 %v463, 6.0
      %v480 = vmin.f32 %v464, 6.0
      %v481 = vmin.f32 %v465, 6.0
      %v482 = vmin.f32 %v466, 6.0
      %v483 = vmin.f32 %v467, 6.0
      %v484 = vmin.f32 %v468, 6.0
      %v485 = vmin.f32 %v469, 6.0
      %v486 = vmin.f32 %v470, 6.0
      %v487 = vmin.f32 %v471, 6.0
      %v488 = vmin.f32 %v472, 6.0
      %v489 = vld [vmem:[%s346] sm:$0xff]
      %v490 = vld [vmem:[%s346 + $0x8] sm:$0xff]
      %v491 = vld [vmem:[%s346 + $0x10] sm:$0xff]
      %v492 = vld [vmem:[%s346 + $0x18] sm:$0xff]
      %v493 = vld [vmem:[%s346 + $0x20] sm:$0xff]
      %v494 = vld [vmem:[%s346 + $0x28] sm:$0xff]
      %v495 = vld [vmem:[%s346 + $0x30] sm:$0xff]
      %v496 = vld [vmem:[%s346 + $0x38] sm:$0xff]
      %v497 = vmax.f32 %v489, 0.0
      %v498 = vmax.f32 %v490, 0.0
      %v499 = vmax.f32 %v491, 0.0
      %v500 = vmax.f32 %v492, 0.0
      %v501 = vmax.f32 %v493, 0.0
      %v502 = vmax.f32 %v494, 0.0
      %v503 = vmax.f32 %v495, 0.0
      %v504 = vmax.f32 %v496, 0.0
      %v505 = vmin.f32 %v497, 6.0
      %v506 = vmin.f32 %v498, 6.0
      %v507 = vmin.f32 %v499, 6.0
      %v508 = vmin.f32 %v500, 6.0
      %v509 = vmin.f32 %v501, 6.0
      %v510 = vmin.f32 %v502, 6.0
      %v511 = vmin.f32 %v503, 6.0
      %v512 = vmin.f32 %v504, 6.0
      %v513 = vld [vmem:[%s4] sm:$0x7]
      %v514 = vld [vmem:[%s4 + $0x4] sm:$0x7]
      %v515 = vld [vmem:[%s4 + $0x8] sm:$0x7]
      %v516 = vlaneseq
      %v517 = vshrl.u32 %v516, 7
      %v518 = vsub.s32 0, %v517
      %v519 = vrot.slane %v513, %v518
      %v520 = vmul.f32 %v396, %v519
      %v521 = vmul.f32 %v398, %v519
      %v522 = vmul.f32 %v400, %v519
      %v523 = vmul.f32 %v402, %v519
      %v524 = vmul.f32 %v404, %v519
      %v525 = vmul.f32 %v406, %v519
      %v526 = vmul.f32 %v408, %v519
      %v527 = vmul.f32 %v410, %v519
      %v528 = vadd.f32 %v520, 0.0
      %v529 = vadd.f32 %v521, 0.0
      %v530 = vadd.f32 %v522, 0.0
      %v531 = vadd.f32 %v523, 0.0
      %v532 = vadd.f32 %v524, 0.0
      %v533 = vadd.f32 %v525, 0.0
      %v534 = vadd.f32 %v526, 0.0
      %v535 = vadd.f32 %v527, 0.0
      %v536 = vlaneseq
      %v537 = vshrl.u32 %v536, 7
      %v538 = vsub.s32 1, %v537
      %v539 = vrot.slane %v513, %v538
      %v540 = vmul.f32 %v432, %v539
      %v541 = vmul.f32 %v433, %v539
      %v542 = vmul.f32 %v434, %v539
      %v543 = vmul.f32 %v435, %v539
      %v544 = vmul.f32 %v436, %v539
      %v545 = vmul.f32 %v437, %v539
      %v546 = vmul.f32 %v438, %v539
      %v547 = vmul.f32 %v439, %v539
      %v548 = vadd.f32 %v528, %v540
      %v549 = vadd.f32 %v529, %v541
      %v550 = vadd.f32 %v530, %v542
      %v551 = vadd.f32 %v531, %v543
      %v552 = vadd.f32 %v532, %v544
      %v553 = vadd.f32 %v533, %v545
      %v554 = vadd.f32 %v534, %v546
      %v555 = vadd.f32 %v535, %v547
      %v556 = vlaneseq
      %v557 = vshrl.u32 %v556, 7
      %v558 = vsub.s32 2, %v557
      %v559 = vrot.slane %v513, %v558
      %v560 = vmul.f32 %v396, %v559
      %v561 = vmul.f32 %v397, %v559
      %v562 = vmul.f32 %v398, %v559
      %v563 = vmul.f32 %v399, %v559
      %v564 = vmul.f32 %v400, %v559
      %v565 = vmul.f32 %v401, %v559
      %v566 = vmul.f32 %v402, %v559
      %v567 = vmul.f32 %v403, %v559
      %v568 = vmul.f32 %v404, %v559
      %v569 = vmul.f32 %v405, %v559
      %v570 = vmul.f32 %v406, %v559
      %v571 = vmul.f32 %v407, %v559
      %v572 = vmul.f32 %v408, %v559
      %v573 = vmul.f32 %v409, %v559
      %v574 = vmul.f32 %v410, %v559
      %v575 = vmul.f32 %v411, %v559
      %vm592 = vcmask 1046528
      %v593 = vrot.slane %v560, 1
      %v594 = vrot.slane %v561, 1
      %v595 = vsel %vm592, %v593, %v594
      %v596 = vrot.slane %v562, 1
      %v597 = vrot.slane %v563, 1
      %v598 = vsel %vm592, %v596, %v597
      %v599 = vrot.slane %v564, 1
      %v600 = vrot.slane %v565, 1
      %v601 = vsel %vm592, %v599, %v600
      %v602 = vrot.slane %v566, 1
      %v603 = vrot.slane %v567, 1
      %v604 = vsel %vm592, %v602, %v603
      %v605 = vrot.slane %v568, 1
      %v606 = vrot.slane %v569, 1
      %v607 = vsel %vm592, %v605, %v606
      %v608 = vrot.slane %v570, 1
      %v609 = vrot.slane %v571, 1
      %v610 = vsel %vm592, %v608, %v609
      %v611 = vrot.slane %v572, 1
      %v612 = vrot.slane %v573, 1
      %v613 = vsel %vm592, %v611, %v612
      %v614 = vrot.slane %v574, 1
      %v615 = vrot.slane %v575, 1
      %v616 = vsel %vm592, %v614, %v615
      %v625 = vadd.f32 %v548, %v595
      %v626 = vadd.f32 %v549, %v598
      %v627 = vadd.f32 %v550, %v601
      %v628 = vadd.f32 %v551, %v604
      %v629 = vadd.f32 %v552, %v607
      %v630 = vadd.f32 %v553, %v610
      %v631 = vadd.f32 %v554, %v613
      %v632 = vadd.f32 %v555, %v616
      %v633 = vlaneseq
      %v634 = vshrl.u32 %v633, 7
      %v635 = vsub.s32 0, %v634
      %v636 = vrot.slane %v514, %v635
      %v637 = vmul.f32 %v473, %v636
      %v638 = vmul.f32 %v475, %v636
      %v639 = vmul.f32 %v477, %v636
      %v640 = vmul.f32 %v479, %v636
      %v641 = vmul.f32 %v481, %v636
      %v642 = vmul.f32 %v483, %v636
      %v643 = vmul.f32 %v485, %v636
      %v644 = vmul.f32 %v487, %v636
      %v645 = vadd.f32 %v625, %v637
      %v646 = vadd.f32 %v626, %v638
      %v647 = vadd.f32 %v627, %v639
      %v648 = vadd.f32 %v628, %v640
      %v649 = vadd.f32 %v629, %v641
      %v650 = vadd.f32 %v630, %v642
      %v651 = vadd.f32 %v631, %v643
      %v652 = vadd.f32 %v632, %v644
      %v653 = vlaneseq
      %v654 = vshrl.u32 %v653, 7
      %v655 = vsub.s32 1, %v654
      %v656 = vrot.slane %v514, %v655
      %v657 = vmul.f32 %v505, %v656
      %v658 = vmul.f32 %v506, %v656
      %v659 = vmul.f32 %v507, %v656
      %v660 = vmul.f32 %v508, %v656
      %v661 = vmul.f32 %v509, %v656
      %v662 = vmul.f32 %v510, %v656
      %v663 = vmul.f32 %v511, %v656
      %v664 = vmul.f32 %v512, %v656
      %v665 = vadd.f32 %v645, %v657
      %v666 = vadd.f32 %v646, %v658
      %v667 = vadd.f32 %v647, %v659
      %v668 = vadd.f32 %v648, %v660
      %v669 = vadd.f32 %v649, %v661
      %v670 = vadd.f32 %v650, %v662
      %v671 = vadd.f32 %v651, %v663
      %v672 = vadd.f32 %v652, %v664
      %v673 = vlaneseq
      %v674 = vshrl.u32 %v673, 7
      %v675 = vsub.s32 2, %v674
      %v676 = vrot.slane %v514, %v675
      %v677 = vmul.f32 %v473, %v676
      %v678 = vmul.f32 %v474, %v676
      %v679 = vmul.f32 %v475, %v676
      %v680 = vmul.f32 %v476, %v676
      %v681 = vmul.f32 %v477, %v676
      %v682 = vmul.f32 %v478, %v676
      %v683 = vmul.f32 %v479, %v676
      %v684 = vmul.f32 %v480, %v676
      %v685 = vmul.f32 %v481, %v676
      %v686 = vmul.f32 %v482, %v676
      %v687 = vmul.f32 %v483, %v676
      %v688 = vmul.f32 %v484, %v676
      %v689 = vmul.f32 %v485, %v676
      %v690 = vmul.f32 %v486, %v676
      %v691 = vmul.f32 %v487, %v676
      %v692 = vmul.f32 %v488, %v676
      %v709 = vrot.slane %v677, 1
      %v710 = vrot.slane %v678, 1
      %v711 = vsel %vm592, %v709, %v710
      %v712 = vrot.slane %v679, 1
      %v713 = vrot.slane %v680, 1
      %v714 = vsel %vm592, %v712, %v713
      %v715 = vrot.slane %v681, 1
      %v716 = vrot.slane %v682, 1
      %v717 = vsel %vm592, %v715, %v716
      %v718 = vrot.slane %v683, 1
      %v719 = vrot.slane %v684, 1
      %v720 = vsel %vm592, %v718, %v719
      %v721 = vrot.slane %v685, 1
      %v722 = vrot.slane %v686, 1
      %v723 = vsel %vm592, %v721, %v722
      %v724 = vrot.slane %v687, 1
      %v725 = vrot.slane %v688, 1
      %v726 = vsel %vm592, %v724, %v725
      %v727 = vrot.slane %v689, 1
      %v728 = vrot.slane %v690, 1
      %v729 = vsel %vm592, %v727, %v728
      %v730 = vrot.slane %v691, 1
      %v731 = vrot.slane %v692, 1
      %v732 = vsel %vm592, %v730, %v731
      %v741 = vadd.f32 %v665, %v711
      %v742 = vadd.f32 %v666, %v714
      %v743 = vadd.f32 %v667, %v717
      %v744 = vadd.f32 %v668, %v720
      %v745 = vadd.f32 %v669, %v723
      %v746 = vadd.f32 %v670, %v726
      %v747 = vadd.f32 %v671, %v729
      %v748 = vadd.f32 %v672, %v732
      %v749 = vlaneseq
      %v750 = vshrl.u32 %v749, 7
      %v751 = vsub.s32 0, %v750
      %v752 = vrot.slane %v515, %v751
      %v753 = vmul.f32 %v398, %v752
      %v754 = vmul.f32 %v400, %v752
      %v755 = vmul.f32 %v402, %v752
      %v756 = vmul.f32 %v404, %v752
      %v757 = vmul.f32 %v406, %v752
      %v758 = vmul.f32 %v408, %v752
      %v759 = vmul.f32 %v410, %v752
      %v760 = vmul.f32 %v412, %v752
      %v761 = vadd.f32 %v741, %v753
      %v762 = vadd.f32 %v742, %v754
      %v763 = vadd.f32 %v743, %v755
      %v764 = vadd.f32 %v744, %v756
      %v765 = vadd.f32 %v745, %v757
      %v766 = vadd.f32 %v746, %v758
      %v767 = vadd.f32 %v747, %v759
      %v768 = vadd.f32 %v748, %v760
      %v769 = vlaneseq
      %v770 = vshrl.u32 %v769, 7
      %v771 = vsub.s32 1, %v770
      %v772 = vrot.slane %v515, %v771
      %v773 = vmul.f32 %v433, %v772
      %v774 = vmul.f32 %v434, %v772
      %v775 = vmul.f32 %v435, %v772
      %v776 = vmul.f32 %v436, %v772
      %v777 = vmul.f32 %v437, %v772
      %v778 = vmul.f32 %v438, %v772
      %v779 = vmul.f32 %v439, %v772
      %v780 = vmul.f32 %v440, %v772
      %v781 = vadd.f32 %v761, %v773
      %v782 = vadd.f32 %v762, %v774
      %v783 = vadd.f32 %v763, %v775
      %v784 = vadd.f32 %v764, %v776
      %v785 = vadd.f32 %v765, %v777
      %v786 = vadd.f32 %v766, %v778
      %v787 = vadd.f32 %v767, %v779
      %v788 = vadd.f32 %v768, %v780
      %v789 = vlaneseq
      %v790 = vshrl.u32 %v789, 7
      %v791 = vsub.s32 2, %v790
      %v792 = vrot.slane %v515, %v791
      %v793 = vmul.f32 %v398, %v792
      %v794 = vmul.f32 %v399, %v792
      %v795 = vmul.f32 %v400, %v792
      %v796 = vmul.f32 %v401, %v792
      %v797 = vmul.f32 %v402, %v792
      %v798 = vmul.f32 %v403, %v792
      %v799 = vmul.f32 %v404, %v792
      %v800 = vmul.f32 %v405, %v792
      %v801 = vmul.f32 %v406, %v792
      %v802 = vmul.f32 %v407, %v792
      %v803 = vmul.f32 %v408, %v792
      %v804 = vmul.f32 %v409, %v792
      %v805 = vmul.f32 %v410, %v792
      %v806 = vmul.f32 %v411, %v792
      %v807 = vmul.f32 %v412, %v792
      %v808 = vmul.f32 %v413, %v792
      %v825 = vrot.slane %v793, 1
      %v826 = vrot.slane %v794, 1
      %v827 = vsel %vm592, %v825, %v826
      %v828 = vrot.slane %v795, 1
      %v829 = vrot.slane %v796, 1
      %v830 = vsel %vm592, %v828, %v829
      %v831 = vrot.slane %v797, 1
      %v832 = vrot.slane %v798, 1
      %v833 = vsel %vm592, %v831, %v832
      %v834 = vrot.slane %v799, 1
      %v835 = vrot.slane %v800, 1
      %v836 = vsel %vm592, %v834, %v835
      %v837 = vrot.slane %v801, 1
      %v838 = vrot.slane %v802, 1
      %v839 = vsel %vm592, %v837, %v838
      %v840 = vrot.slane %v803, 1
      %v841 = vrot.slane %v804, 1
      %v842 = vsel %vm592, %v840, %v841
      %v843 = vrot.slane %v805, 1
      %v844 = vrot.slane %v806, 1
      %v845 = vsel %vm592, %v843, %v844
      %v846 = vrot.slane %v807, 1
      %v847 = vrot.slane %v808, 1
      %v848 = vsel %vm592, %v846, %v847
      %v857 = vadd.f32 %v781, %v827
      %v858 = vadd.f32 %v782, %v830
      %v859 = vadd.f32 %v783, %v833
      %v860 = vadd.f32 %v784, %v836
      %v861 = vadd.f32 %v785, %v839
      %v862 = vadd.f32 %v786, %v842
      %v863 = vadd.f32 %v787, %v845
      %v864 = vadd.f32 %v788, %v848
      %865 = vst [vmem:[%s351] sm:$0xff] %v857
      %866 = vst [vmem:[%s351 + $0x8] sm:$0xff] %v858
      %867 = vst [vmem:[%s351 + $0x10] sm:$0xff] %v859
      %868 = vst [vmem:[%s351 + $0x18] sm:$0xff] %v860
      %869 = vst [vmem:[%s351 + $0x20] sm:$0xff] %v861
      %870 = vst [vmem:[%s351 + $0x28] sm:$0xff] %v862
      %871 = vst [vmem:[%s351 + $0x30] sm:$0xff] %v863
      %872 = vst [vmem:[%s351 + $0x38] sm:$0xff] %v864
      %v873 = vadd.f32 %v857, %v858
      %v874 = vadd.f32 %v873, %v859
      %v875 = vadd.f32 %v874, %v860
      %v876 = vadd.f32 %v875, %v861
      %v877 = vadd.f32 %v876, %v862
      %v878 = vadd.f32 %v877, %v863
      %v879 = vadd.f32 %v878, %v864
      %v880 = vrot.slane %v879, 4
      %v881 = vadd.f32 %v879, %v880
      %v882 = vrot.slane %v881, 2
      %v883 = vadd.f32 %v881, %v882
      %v884 = vrot.slane %v883, 1
      %v885 = vadd.f32 %v883, %v884
      %v886 = vmul.f32 %v857, %v857
      %v887 = vmul.f32 %v858, %v858
      %v888 = vmul.f32 %v859, %v859
      %v889 = vmul.f32 %v860, %v860
      %v890 = vmul.f32 %v861, %v861
      %v891 = vmul.f32 %v862, %v862
      %v892 = vmul.f32 %v863, %v863
      %v893 = vmul.f32 %v864, %v864
      %v894 = vadd.f32 %v886, %v887
      %v895 = vadd.f32 %v894, %v888
      %v896 = vadd.f32 %v895, %v889
      %v897 = vadd.f32 %v896, %v890
      %v898 = vadd.f32 %v897, %v891
      %v899 = vadd.f32 %v898, %v892
      %v900 = vadd.f32 %v899, %v893
      %v901 = vrot.slane %v900, 4
      %v902 = vadd.f32 %v900, %v901
      %v903 = vrot.slane %v902, 2
      %v904 = vadd.f32 %v902, %v903
      %v905 = vrot.slane %v904, 1
      %v906 = vadd.f32 %v904, %v905
      %907 = vst [vmem:[%s355] sm:$0xff] %v885
      %908 = vst [vmem:[%s359] sm:$0xff] %v906
      %p909 = scmp.lt.s32.totalorder %s19, 1
      %s910 = scalar_select %p909, %s19, 1
      %s911 = smul.addr %s910, 8
      %s912 = smul.addr %s911, 8
      %s913 = scalar_lea.vmem %s5, %s912
      %p914 = scmp.lt.s32.totalorder %s19, 1
      %s915 = scalar_select %p914, %s19, 1
      %s916 = smul.addr %s915, 8
      %s917 = scalar_lea.vmem %s6, %s916
      %p918 = scmp.lt.s32.totalorder %s19, 1
      %s919 = scalar_select %p918, %s19, 1
      %s920 = smul.addr %s919, 8
      %s921 = scalar_lea.vmem %s7, %s920
      // Predicated region
      $region41: #{model_forward.3} parent=39 // pred_check
        %p922 = pneg %p162
      $region42: #{model_forward.3} parent=39 // pred_check_branch
        %924 = sbr.rel (%p922) target = $region44
      $region43: #{model_forward.3} parent=39 // pred_region
        _
      $region44: #{model_forward.3} parent=39 // pred_fallthru
        _
      // Predicated region
      $region45: #{model_forward.3} parent=39 // pred_check
        %p925 = pneg %p188
      $region46: #{model_forward.3} parent=39 // pred_check_branch
        %927 = sbr.rel (%p925) target = $region48
      $region47: #{model_forward.3} parent=39 // pred_region
        _
      $region48: #{model_forward.3} parent=39 // pred_fallthru
        _
      // Predicated region
      $region49: #{model_forward.3} parent=39 // pred_check
        %p928 = pneg %p214
      $region50: #{model_forward.3} parent=39 // pred_check_branch
        %930 = sbr.rel (%p928) target = $region52
      $region51: #{model_forward.3} parent=39 // pred_region
        _
      $region52: #{model_forward.3} parent=39 // pred_fallthru
        _
    $region40: #{model_forward.3} parent=5 // pred_fallthru
      _
    %p931 = scmp.le.s32.totalorder 2, %s14
    // Predicated region
    $region53: #{model_forward.3} parent=5 // pred_check
      %p932 = pneg %p931
    $region54: #{model_forward.3} parent=5 // pred_check_branch
      %934 = sbr.rel (%p932) target = $region56
    $region55: #{model_forward.3} parent=5 // pred_region
      %s935 = ssub.s32 %s14, 2
      // Predicated region
      $region57: #{model_forward.3} parent=55 // pred_check
        %p936 = pneg %p168
      $region58: #{model_forward.3} parent=55 // pred_check_branch
        %938 = sbr.rel (%p936) target = $region60
      $region59: #{model_forward.3} parent=55 // pred_region
        %p939 = scmp.lt.s32.totalorder %s20, 1
        %s940 = scalar_select %p939, %s20, 1
        %s941 = smul.addr %s940, 8
        %s942 = smul.addr %s941, 8
        %s943 = scalar_lea.vmem %s5, %s942
      $region60: #{model_forward.3} parent=55 // pred_fallthru
        _
      // Predicated region
      $region61: #{model_forward.3} parent=55 // pred_check
        %p944 = pneg %p194
      $region62: #{model_forward.3} parent=55 // pred_check_branch
        %946 = sbr.rel (%p944) target = $region64
      $region63: #{model_forward.3} parent=55 // pred_region
        %p947 = scmp.lt.s32.totalorder %s20, 1
        %s948 = scalar_select %p947, %s20, 1
        %s949 = smul.addr %s948, 8
        %s950 = scalar_lea.vmem %s6, %s949
      $region64: #{model_forward.3} parent=55 // pred_fallthru
        _
      // Predicated region
      $region65: #{model_forward.3} parent=55 // pred_check
        %p951 = pneg %p220
      $region66: #{model_forward.3} parent=55 // pred_check_branch
        %953 = sbr.rel (%p951) target = $region68
      $region67: #{model_forward.3} parent=55 // pred_region
        %p954 = scmp.lt.s32.totalorder %s20, 1
        %s955 = scalar_select %p954, %s20, 1
        %s956 = smul.addr %s955, 8
        %s957 = scalar_lea.vmem %s7, %s956
      $region68: #{model_forward.3} parent=55 // pred_fallthru
        _
    $region56: #{model_forward.3} parent=5 // pred_fallthru
      _
  $region6: #{model_forward.3} parent=0 // loop_footer
    %s18 = sadd.s32 1, %s14
  $region7: #{model_forward.3} parent=0 // loop_footer_branch
    %13 = sbr.rel target = $region3
  $region8: #{model_forward.3} parent=0 // loop_exit
    _

</llo_original>
